<compile_context>
chip_gen: v5e
topology: v5e:2x2
jax: 0.10.0
libtpu: 0.0.40
codegen_flags: <defaults>
</compile_context>

<pallas_src>
import math

import jax
import jax.numpy as jnp
import numpy as np
from jax import lax
from jax.experimental import pallas as pl
from jax.experimental.pallas import tpu as pltpu

# ----------------- small, module-consistent hyper-parameters -----------------
BATCH = 2
NPRATIO = 1
CDD = NPRATIO + 1            # cdd_size
HIS = 3                      # his_size
SIG_LEN = 7                  # title_size / signal_length
T_LEN = 2 * SIG_LEN + 1      # transformer_length (cdd | sep | his)
VOCAB = 50
EMB_DIM = 16                 # embedding_dim
FILTER_NUM = 32              # filter_num (CNN out channels)
HEAD_NUM = 2
VALUE_DIM = 16
REPR_DIM = HEAD_NUM * VALUE_DIM
QUERY_DIM = 32
DROPOUT_P = 0.0


def _bf16_exp_supported():
    """bf16 exp on the EUP only pays off on v6e/v7x; keep f32 on older chips."""
    try:
        kind = jax.devices()[0].device_kind.lower()
    except Exception:
        return False
    return ("v6" in kind) or ("v7" in kind) or ("7x" in kind)


# ------------------------------ Pallas kernel --------------------------------
def _make_encoder_kernel(head_num, filter_num, nth, nhp, Tpad, Tlen, use_bf16_exp):
    """Fused: Conv1d(k=3,pad=1)+ReLU, multi-head self-attn, additive word attn.

    Operates on a flat (num_seq_per_step * Tpad, channels) token layout; the
    per-sequence structure is enforced by a block-diagonal bias / group
    matrices generated in-kernel from iota."""
    nseq = nth // Tpad
    pow2 = (Tpad & (Tpad - 1)) == 0
    shift = Tpad.bit_length() - 1

    def seq_of(idx):            # sequence index of a flat token row/col
        return jnp.right_shift(idx, shift) if pow2 else idx // Tpad

    def pos_of(idx):            # position of a token inside its padded sequence
        return jnp.bitwise_and(idx, Tpad - 1) if pow2 else idx % Tpad

    def kernel(x_ref, wconv_ref, bconv_ref, wq_ref, bq_ref, wv_ref, bv_ref,
               wk_ref, bk_ref, qword_ref, out_ref):
        # --- Conv1d as a single im2col matmul (input is [x_{t-1}|x_t|x_{t+1}]) ---
        h = jnp.dot(x_ref[...], wconv_ref[...], preferred_element_type=jnp.float32)
        h = jnp.maximum(h + bconv_ref[...], 0.0)          # ReLU (dropout_p = 0)
        hb = h.astype(jnp.bfloat16)                       # (nth, F)

        # --- all heads' Q projection (scale folded into wq/bq) ---
        q_all = jnp.dot(hb, wq_ref[...], preferred_element_type=jnp.float32) + bq_ref[...]
        # stack heads along rows -> one score / softmax / PV chain for all heads
        q_stack = jnp.concatenate(
            [q_all[:, i * filter_num:(i + 1) * filter_num] for i in range(head_num)],
            axis=0).astype(jnp.bfloat16)                  # (H*nth, F)

        # --- block-diagonal mask bias generated in-kernel (no HBM constants) ---
        r = lax.broadcasted_iota(jnp.int32, (head_num * nth, nth), 0)
        c = lax.broadcasted_iota(jnp.int32, (head_num * nth, nth), 1)
        rs, cs = seq_of(r), seq_of(c)
        same = rs == cs
        for hi in range(1, head_num):                     # head hi rows are offset by hi*nseq
            same = jnp.logical_or(same, rs == cs + hi * nseq)
        ok = jnp.logical_and(same, pos_of(c) < Tlen)
        bias = jnp.where(ok, 0.0, -1e9)                   # (H*nth, nth)

        # --- single stacked scaled-dot-product self attention ---
        s = lax.dot_general(q_stack, hb, (((1,), (1,)), ((), ())),
                            preferred_element_type=jnp.float32) + bias
        s = s - jnp.max(s, axis=-1, keepdims=True)
        p = jnp.exp(s.astype(jnp.bfloat16)) if use_bf16_exp else jnp.exp(s)
        denom = jnp.sum(p.astype(jnp.float32), axis=-1, keepdims=True)
        o_stack = jnp.dot(p.astype(jnp.bfloat16), hb,
                          preferred_element_type=jnp.float32)          # (H*nth, F)
        o_stack = o_stack * pl.reciprocal(denom, approx=True)          # normalize after PV

        # --- regroup head rows -> lanes, block-diagonal V projection ---
        ocat = jnp.concatenate(
            [o_stack[i * nth:(i + 1) * nth] for i in range(head_num)], axis=-1)
        val = jnp.dot(ocat.astype(jnp.bfloat16), wv_ref[...],
                      preferred_element_type=jnp.float32) + bv_ref[...]          # (nth, R)

        # --- additive word attention (scale folded into qword) ---
        key = jnp.tanh(jnp.dot(val.astype(jnp.bfloat16), wk_ref[...],
                               preferred_element_type=jnp.float32) + bk_ref[...])
        ws = jnp.dot(key, qword_ref[...], preferred_element_type=jnp.float32)    # (nth, 1)

        mask01 = jnp.where(ok[:nth, :], 1.0, 0.0)         # same-seq & real-token mask
        # per-sequence shift (mean over real tokens): softmax-exact, no
        # cross-sequence coupling through a global max.
        mean_full = jnp.dot(mask01, ws, preferred_element_type=jnp.float32) * (1.0 / Tlen)
        e = jnp.exp(ws - mean_full)
        denom_full = jnp.dot(mask01, e, preferred_element_type=jnp.float32)
        a = e / denom_full                                # exact division (tiny)

        # group matrix (nhp, nth), rows >= nseq are zero (sublane padding)
        gr = lax.broadcasted_iota(jnp.int32, (nhp, nth), 0)
        gc = lax.broadcasted_iota(jnp.int32, (nhp, nth), 1)
        g = jnp.where(jnp.logical_and(gr == seq_of(gc), pos_of(gc) < Tlen), 1.0, 0.0)
        out_ref[0] = jnp.dot(g, a * val, preferred_element_type=jnp.float32)      # (nhp, R)

    return kernel


# --------------------------------- wrapper -----------------------------------
def gca_forward(params, cdd_tokens, his_tokens):
    B, C, L = cdd_tokens.shape
    Hh = his_tokens.shape[1]
    Tlen = 2 * L + 1
    Tpad = ((Tlen + 7) // 8) * 8                          # sublane-aligned sequence length
    N = B * C * Hh
    E, F, Hn, V, R, Q = EMB_DIM, FILTER_NUM, HEAD_NUM, VALUE_DIM, REPR_DIM, QUERY_DIM
    scale = 1.0 / math.sqrt(E)

    # --- _fusion + embedding gather (JAX glue) ---
    fusion = jnp.zeros((B, C, Hh, Tlen), jnp.int32)
    fusion = fusion.at[..., :L].set(cdd_tokens[:, :, None, :])
    fusion = fusion.at[..., L + 1:].set(his_tokens[:, None, :, :])
    fusion = fusion.at[..., L].set(1)
    x = params['embedding'][fusion].reshape(N, Tlen, E).astype(jnp.float32)

    # --- im2col for Conv1d(kernel=3, padding=1); pad T to sublane multiple ---
    zrow = jnp.zeros((N, 1, E), jnp.float32)
    xc = jnp.concatenate(
        [jnp.concatenate([zrow, x[:, :-1]], axis=1),      # x[t-1] (zero-padded)
         x,                                               # x[t]
         jnp.concatenate([x[:, 1:], zrow], axis=1)],      # x[t+1] (zero-padded)
        axis=-1)                                          # (N, Tlen, 3E)
    xc = jnp.pad(xc, ((0, 0), (0, Tpad - Tlen), (0, 0)))  # (N, Tpad, 3E), pad rows = 0

    # nsplit=2: real parallelism on v7x's two TensorCores; on single-TC chips it
    # is a serial loop but keeps the quadratic masked-score cost per step low.
    nsplit = 2 if N % 2 == 0 else 1
    nh = N // nsplit
    nhp = ((nh + 7) // 8) * 8                             # sublane-padded #sequences/step
    nth = nh * Tpad
    x2d = xc.reshape(N * Tpad, 3 * E).astype(jnp.bfloat16)

    # --- packed / scale-folded weights (bf16 at MXU inputs, f32 biases) ---
    wconv_flat = params['wconv'].reshape(3 * E, F).astype(jnp.bfloat16)           # (3E, F)
    wq_all = (jnp.concatenate([params['wq'][i] for i in range(Hn)], axis=-1)
              * scale).astype(jnp.bfloat16)                                       # (F, H*F)
    bq_all = params['bq'].reshape(1, Hn * F) * scale
    wv_block = jnp.zeros((Hn * F, Hn * V), jnp.float32)
    for i in range(Hn):                                   # block-diagonal V projection
        wv_block = wv_block.at[i * F:(i + 1) * F, i * V:(i + 1) * V].set(params['wv'][i])
    wv_block = wv_block.astype(jnp.bfloat16)
    bv_cat = params['bv'].reshape(1, Hn * V)
    wk_bf = params['wk'].astype(jnp.bfloat16)
    qword_t = params['qword'].T * scale                   # (Q, 1), scale folded in

    kernel = _make_encoder_kernel(Hn, F, nth, nhp, Tpad, Tlen, _bf16_exp_supported())

    rep = pl.pallas_call(
        kernel,
        out_shape=jax.ShapeDtypeStruct((nsplit, nhp, R), jnp.float32),
        grid=(nsplit,),
        in_specs=[
            pl.BlockSpec((nth, 3 * E), lambda k: (k, 0)),         # x (im2col, bf16)
            pl.BlockSpec((3 * E, F), lambda k: (0, 0)),           # conv weight
            pl.BlockSpec((1, F), lambda k: (0, 0)),               # conv bias
            pl.BlockSpec((F, Hn * F), lambda k: (0, 0)),          # stacked, pre-scaled Q weight
            pl.BlockSpec((1, Hn * F), lambda k: (0, 0)),          # stacked, pre-scaled Q bias
            pl.BlockSpec((Hn * F, Hn * V), lambda k: (0, 0)),     # block-diag V weight
            pl.BlockSpec((1, Hn * V), lambda k: (0, 0)),          # concatenated V bias
            pl.BlockSpec((R, Q), lambda k: (0, 0)),               # key projection
            pl.BlockSpec((1, Q), lambda k: (0, 0)),               # key bias
            pl.BlockSpec((Q, 1), lambda k: (0, 0)),               # word query (pre-scaled)
        ],
        out_specs=pl.BlockSpec((1, nhp, R), lambda k: (k, 0, 0)),
        compiler_params=pltpu.CompilerParams(dimension_semantics=("parallel",)),
    )(x2d, wconv_flat, params['bconv'], wq_all, bq_all, wv_block, bv_cat,
      wk_bf, params['bk'], qword_t)

    # --- tiny tail (history mean + learningToRank + log_softmax) in plain JAX ---
    rep = rep[:, :nh, :].reshape(B, C, Hh, R)
    m = jnp.mean(rep, axis=2)
    logits = jnp.einsum('bcr,ro->bco', m, params['wr'])[..., 0] + params['br'][0, 0]
    return jax.nn.log_softmax(logits, axis=1)             # [B, CDD]


# ------------------------- pure-JAX reference (check) ------------------------
def reference_forward(params, cdd_tokens, his_tokens):
    B, C, L = cdd_tokens.shape
    Hh = his_tokens.shape[1]
    Tlen = 2 * L + 1
    fusion = jnp.zeros((B, C, Hh, Tlen), jnp.int32)
    fusion = fusion.at[..., :L].set(cdd_tokens[:, :, None, :])
    fusion = fusion.at[..., L + 1:].set(his_tokens[:, None, :, :])
    fusion = fusion.at[..., L].set(1)
    x = params['embedding'][fusion].reshape(-1, Tlen, EMB_DIM).astype(jnp.float32)

    xp = jnp.pad(x, ((0, 0), (1, 1), (0, 0)))
    h = sum(jnp.einsum('nte,ef->ntf', xp[:, k:k + Tlen], params['wconv'][k])
            for k in range(3))
    h = jax.nn.relu(h + params['bconv'][0])

    scale = 1.0 / math.sqrt(EMB_DIM)
    heads = []
    for i in range(HEAD_NUM):
        q = jnp.einsum('ntf,fg->ntg', h, params['wq'][i]) + params['bq'][i]
        s = jnp.einsum('ntg,nsg->nts', q, h) * scale
        a = jax.nn.softmax(s, axis=-1)
        o = jnp.einsum('nts,nsf->ntf', a, h)
        heads.append(jnp.einsum('ntf,fv->ntv', o, params['wv'][i]) + params['bv'][i])
    val = jnp.concatenate(heads, axis=-1)
    kk = jnp.tanh(jnp.einsum('ntr,rq->ntq', val, params['wk']) + params['bk'][0])
    ws = jnp.einsum('oq,ntq->not', params['qword'], kk) * scale
    aw = jax.nn.softmax(ws, axis=-1)
    rep = jnp.einsum('not,ntr->nor', aw, val)[:, 0, :].reshape(B, C, Hh, REPR_DIM)
    m = jnp.mean(rep, axis=2)
    logits = jnp.einsum('bcr,ro->bco', m, params['wr'])[..., 0] + params['br'][0, 0]
    return jax.nn.log_softmax(logits, axis=1)


# ----------------------------------- main ------------------------------------
def init_params(key):
    ks = jax.random.split(key, 12)
    s = 0.1
    return {
        'embedding': jax.random.normal(ks[0], (VOCAB, EMB_DIM), jnp.float32),
        'wconv': jax.random.normal(ks[1], (3, EMB_DIM, FILTER_NUM), jnp.float32) * s,
        'bconv': jax.random.normal(ks[2], (1, FILTER_NUM), jnp.float32) * s,
        'wq': jax.random.normal(ks[3], (HEAD_NUM, FILTER_NUM, FILTER_NUM), jnp.float32) * s,
        'bq': jax.random.normal(ks[4], (HEAD_NUM, FILTER_NUM), jnp.float32) * s,
        'wv': jax.random.normal(ks[5], (HEAD_NUM, FILTER_NUM, VALUE_DIM), jnp.float32) * s,
        'bv': jax.random.normal(ks[6], (HEAD_NUM, VALUE_DIM), jnp.float32) * s,
        'wk': jax.random.normal(ks[7], (REPR_DIM, QUERY_DIM), jnp.float32) * s,
        'bk': jax.random.normal(ks[8], (1, QUERY_DIM), jnp.float32) * s,
        'qword': jax.random.normal(ks[9], (1, QUERY_DIM), jnp.float32) * s,
        'wr': jax.random.normal(ks[10], (REPR_DIM, 1), jnp.float32) * s,
        'br': jax.random.normal(ks[11], (1, 1), jnp.float32) * s,
    }


if __name__ == "__main__":
    key = jax.random.PRNGKey(0)
    pkey, k1, k2 = jax.random.split(key, 3)
    params = init_params(pkey)

    cdd_tokens = jax.random.randint(k1, (BATCH, CDD, SIG_LEN), 2, VOCAB, dtype=jnp.int32)
    his_tokens = jax.random.randint(k2, (BATCH, HIS, SIG_LEN), 2, VOCAB, dtype=jnp.int32)

    score = jax.jit(gca_forward)(params, cdd_tokens, his_tokens)
    score = jax.block_until_ready(score)

    ref = jax.block_until_ready(reference_forward(params, cdd_tokens, his_tokens))
    np.testing.assert_allclose(np.asarray(score), np.asarray(ref), rtol=5e-2, atol=5e-2)

    print("KERNEL_OK")
</pallas_src>

<mosaic_0001>
module attributes {stable_mosaic.version = 11 : i64} {
  func.func @kernel(%arg0: i32, %arg1: memref<96x48xbf16, #tpu.memory_space<vmem>>, %arg2: memref<48x32xbf16, #tpu.memory_space<vmem>>, %arg3: memref<1x32xf32, #tpu.memory_space<vmem>>, %arg4: memref<32x64xbf16, #tpu.memory_space<vmem>>, %arg5: memref<1x64xf32, #tpu.memory_space<vmem>>, %arg6: memref<64x32xbf16, #tpu.memory_space<vmem>>, %arg7: memref<1x32xf32, #tpu.memory_space<vmem>>, %arg8: memref<32x32xbf16, #tpu.memory_space<vmem>>, %arg9: memref<1x32xf32, #tpu.memory_space<vmem>>, %arg10: memref<32x1xf32, #tpu.memory_space<vmem>>, %arg11: memref<1x8x32xf32, #tpu.memory_space<vmem>>) attributes {dimension_semantics = [#tpu.dimension_semantics<parallel>], iteration_bounds = array<i64: 2>, scalar_prefetch = 0 : i64, scratch_operands = 0 : i64, tpu.core_type = #tpu.core_type<tc>, window_params = [{transform_indices = @transform_0, window_bounds = array<i64: 96, 48>}, {pipeline_mode = #tpu.pipeline_mode<synchronous>, transform_indices = @transform_1, window_bounds = array<i64: 48, 32>}, {pipeline_mode = #tpu.pipeline_mode<synchronous>, transform_indices = @transform_2, window_bounds = array<i64: 1, 32>}, {pipeline_mode = #tpu.pipeline_mode<synchronous>, transform_indices = @transform_3, window_bounds = array<i64: 32, 64>}, {pipeline_mode = #tpu.pipeline_mode<synchronous>, transform_indices = @transform_4, window_bounds = array<i64: 1, 64>}, {pipeline_mode = #tpu.pipeline_mode<synchronous>, transform_indices = @transform_5, window_bounds = array<i64: 64, 32>}, {pipeline_mode = #tpu.pipeline_mode<synchronous>, transform_indices = @transform_6, window_bounds = array<i64: 1, 32>}, {pipeline_mode = #tpu.pipeline_mode<synchronous>, transform_indices = @transform_7, window_bounds = array<i64: 32, 32>}, {pipeline_mode = #tpu.pipeline_mode<synchronous>, transform_indices = @transform_8, window_bounds = array<i64: 1, 32>}, {pipeline_mode = #tpu.pipeline_mode<synchronous>, transform_indices = @transform_9, window_bounds = array<i64: 32, 1>}, {transform_indices = @transform_10, window_bounds = array<i64: 1, 8, 32>}]} {
    %c0 = arith.constant 0 : index
    %c0_0 = arith.constant 0 : index
    %0 = vector.load %arg1[%c0, %c0_0] : memref<96x48xbf16, #tpu.memory_space<vmem>>, vector<96x48xbf16>
    %c0_1 = arith.constant 0 : index
    %c0_2 = arith.constant 0 : index
    %1 = vector.load %arg2[%c0_1, %c0_2] : memref<48x32xbf16, #tpu.memory_space<vmem>>, vector<48x32xbf16>
    %cst = arith.constant dense<0.000000e+00> : vector<96x32xf32>
    %2 = tpu.matmul %0, %1, %cst {dimension_numbers = #tpu.dot_dimension_numbers<[1], [0], [0], [1], [0, 0, 1, 1], [], []>} : vector<96x48xbf16>, vector<48x32xbf16>, vector<96x32xf32> -> vector<96x32xf32>
    %c0_3 = arith.constant 0 : index
    %c0_4 = arith.constant 0 : index
    %3 = vector.load %arg3[%c0_3, %c0_4] : memref<1x32xf32, #tpu.memory_space<vmem>>, vector<1x32xf32>
    %4 = vector.broadcast %3 : vector<1x32xf32> to vector<96x32xf32>
    %5 = arith.addf %2, %4 : vector<96x32xf32>
    %cst_5 = arith.constant 0.000000e+00 : f32
    %6 = vector.broadcast %cst_5 : f32 to vector<96x32xf32>
    %7 = arith.maximumf %5, %6 : vector<96x32xf32>
    %8 = arith.truncf %7 : vector<96x32xf32> to vector<96x32xbf16>
    %c0_6 = arith.constant 0 : index
    %c0_7 = arith.constant 0 : index
    %9 = vector.load %arg4[%c0_6, %c0_7] : memref<32x64xbf16, #tpu.memory_space<vmem>>, vector<32x64xbf16>
    %cst_8 = arith.constant dense<0.000000e+00> : vector<96x64xf32>
    %10 = tpu.matmul %8, %9, %cst_8 {dimension_numbers = #tpu.dot_dimension_numbers<[1], [0], [0], [1], [0, 0, 1, 1], [], []>} : vector<96x32xbf16>, vector<32x64xbf16>, vector<96x64xf32> -> vector<96x64xf32>
    %c0_9 = arith.constant 0 : index
    %c0_10 = arith.constant 0 : index
    %11 = vector.load %arg5[%c0_9, %c0_10] : memref<1x64xf32, #tpu.memory_space<vmem>>, vector<1x64xf32>
    %12 = vector.broadcast %11 : vector<1x64xf32> to vector<96x64xf32>
    %13 = arith.addf %10, %12 : vector<96x64xf32>
    %14 = vector.extract_strided_slice %13 {offsets = [0, 0], sizes = [96, 32], strides = [1, 1]} : vector<96x64xf32> to vector<96x32xf32>
    %15 = vector.extract_strided_slice %13 {offsets = [0, 32], sizes = [96, 32], strides = [1, 1]} : vector<96x64xf32> to vector<96x32xf32>
    %16 = tpu.concatenate %14, %15 in 0 : vector<96x32xf32>, vector<96x32xf32> -> vector<192x32xf32>
    %17 = arith.truncf %16 : vector<192x32xf32> to vector<192x32xbf16>
    %18 = tpu.iota {dimensions = array<i32: 0>} : vector<192x96xi32>
    %19 = tpu.iota {dimensions = array<i32: 1>} : vector<192x96xi32>
    %c4_i32 = arith.constant 4 : i32
    %20 = vector.broadcast %c4_i32 : i32 to vector<192x96xi32>
    %21 = arith.shrsi %18, %20 : vector<192x96xi32>
    %c4_i32_11 = arith.constant 4 : i32
    %22 = vector.broadcast %c4_i32_11 : i32 to vector<192x96xi32>
    %23 = arith.shrsi %19, %22 : vector<192x96xi32>
    %24 = arith.cmpi eq, %21, %23 : vector<192x96xi32>
    %c6_i32 = arith.constant 6 : i32
    %25 = vector.broadcast %c6_i32 : i32 to vector<192x96xi32>
    %26 = arith.addi %23, %25 : vector<192x96xi32>
    %27 = arith.cmpi eq, %21, %26 : vector<192x96xi32>
    %28 = arith.ori %24, %27 : vector<192x96xi1>
    %c15_i32 = arith.constant 15 : i32
    %29 = vector.broadcast %c15_i32 : i32 to vector<192x96xi32>
    %30 = arith.andi %19, %29 : vector<192x96xi32>
    %c15_i32_12 = arith.constant 15 : i32
    %31 = vector.broadcast %c15_i32_12 : i32 to vector<192x96xi32>
    %32 = arith.cmpi slt, %30, %31 : vector<192x96xi32>
    %33 = arith.andi %28, %32 : vector<192x96xi1>
    %cst_13 = arith.constant 0.000000e+00 : f32
    %cst_14 = arith.constant -1.000000e+09 : f32
    %34 = vector.broadcast %cst_13 : f32 to vector<192x96xf32>
    %35 = vector.broadcast %cst_14 : f32 to vector<192x96xf32>
    %36 = arith.select %33, %34, %35 : vector<192x96xi1>, vector<192x96xf32>
    %cst_15 = arith.constant dense<0.000000e+00> : vector<192x96xf32>
    %37 = tpu.matmul %17, %8, %cst_15 {dimension_numbers = #tpu.dot_dimension_numbers<[1], [1], [0], [0], [0, 0, 1, 0], [], []>} : vector<192x32xbf16>, vector<96x32xbf16>, vector<192x96xf32> -> vector<192x96xf32>
    %38 = arith.addf %37, %36 : vector<192x96xf32>
    %cst_16 = arith.constant dense<0xFF800000> : vector<192xf32>
    %39 = vector.multi_reduction <maximumf>, %38, %cst_16 [1] : vector<192x96xf32> to vector<192xf32>
    %40 = vector.shape_cast %39 : vector<192xf32> to vector<192x1xf32>
    %41 = vector.broadcast %40 : vector<192x1xf32> to vector<192x96xf32>
    %42 = arith.subf %38, %41 : vector<192x96xf32>
    %43 = math.exp %42 : vector<192x96xf32>
    %cst_17 = arith.constant dense<0.000000e+00> : vector<192xf32>
    %44 = vector.multi_reduction <add>, %43, %cst_17 [1] : vector<192x96xf32> to vector<192xf32>
    %45 = vector.shape_cast %44 : vector<192xf32> to vector<192x1xf32>
    %46 = arith.truncf %43 : vector<192x96xf32> to vector<192x96xbf16>
    %cst_18 = arith.constant dense<0.000000e+00> : vector<192x32xf32>
    %47 = tpu.matmul %46, %8, %cst_18 {dimension_numbers = #tpu.dot_dimension_numbers<[1], [0], [0], [1], [0, 0, 1, 1], [], []>} : vector<192x96xbf16>, vector<96x32xbf16>, vector<192x32xf32> -> vector<192x32xf32>
    %48 = tpu.reciprocal %45 {approx = true} : vector<192x1xf32> -> vector<192x1xf32>
    %49 = vector.broadcast %48 : vector<192x1xf32> to vector<192x32xf32>
    %50 = arith.mulf %47, %49 : vector<192x32xf32>
    %51 = vector.extract_strided_slice %50 {offsets = [0, 0], sizes = [96, 32], strides = [1, 1]} : vector<192x32xf32> to vector<96x32xf32>
    %52 = vector.extract_strided_slice %50 {offsets = [96, 0], sizes = [96, 32], strides = [1, 1]} : vector<192x32xf32> to vector<96x32xf32>
    %53 = tpu.concatenate %51, %52 in 1 : vector<96x32xf32>, vector<96x32xf32> -> vector<96x64xf32>
    %54 = arith.truncf %53 : vector<96x64xf32> to vector<96x64xbf16>
    %c0_19 = arith.constant 0 : index
    %c0_20 = arith.constant 0 : index
    %55 = vector.load %arg6[%c0_19, %c0_20] : memref<64x32xbf16, #tpu.memory_space<vmem>>, vector<64x32xbf16>
    %cst_21 = arith.constant dense<0.000000e+00> : vector<96x32xf32>
    %56 = tpu.matmul %54, %55, %cst_21 {dimension_numbers = #tpu.dot_dimension_numbers<[1], [0], [0], [1], [0, 0, 1, 1], [], []>} : vector<96x64xbf16>, vector<64x32xbf16>, vector<96x32xf32> -> vector<96x32xf32>
    %c0_22 = arith.constant 0 : index
    %c0_23 = arith.constant 0 : index
    %57 = vector.load %arg7[%c0_22, %c0_23] : memref<1x32xf32, #tpu.memory_space<vmem>>, vector<1x32xf32>
    %58 = vector.broadcast %57 : vector<1x32xf32> to vector<96x32xf32>
    %59 = arith.addf %56, %58 : vector<96x32xf32>
    %60 = arith.truncf %59 : vector<96x32xf32> to vector<96x32xbf16>
    %c0_24 = arith.constant 0 : index
    %c0_25 = arith.constant 0 : index
    %61 = vector.load %arg8[%c0_24, %c0_25] : memref<32x32xbf16, #tpu.memory_space<vmem>>, vector<32x32xbf16>
    %cst_26 = arith.constant dense<0.000000e+00> : vector<96x32xf32>
    %62 = tpu.matmul %60, %61, %cst_26 {dimension_numbers = #tpu.dot_dimension_numbers<[1], [0], [0], [1], [0, 0, 1, 1], [], []>} : vector<96x32xbf16>, vector<32x32xbf16>, vector<96x32xf32> -> vector<96x32xf32>
    %c0_27 = arith.constant 0 : index
    %c0_28 = arith.constant 0 : index
    %63 = vector.load %arg9[%c0_27, %c0_28] : memref<1x32xf32, #tpu.memory_space<vmem>>, vector<1x32xf32>
    %64 = vector.broadcast %63 : vector<1x32xf32> to vector<96x32xf32>
    %65 = arith.addf %62, %64 : vector<96x32xf32>
    %66 = math.tanh %65 : vector<96x32xf32>
    %c0_29 = arith.constant 0 : index
    %c0_30 = arith.constant 0 : index
    %67 = vector.load %arg10[%c0_29, %c0_30] : memref<32x1xf32, #tpu.memory_space<vmem>>, vector<32x1xf32>
    %cst_31 = arith.constant dense<0.000000e+00> : vector<96x1xf32>
    %68 = tpu.matmul %66, %67, %cst_31 {dimension_numbers = #tpu.dot_dimension_numbers<[1], [0], [0], [1], [0, 0, 1, 1], [], []>} : vector<96x32xf32>, vector<32x1xf32>, vector<96x1xf32> -> vector<96x1xf32>
    %69 = vector.extract_strided_slice %33 {offsets = [0, 0], sizes = [96, 96], strides = [1, 1]} : vector<192x96xi1> to vector<96x96xi1>
    %cst_32 = arith.constant 1.000000e+00 : f32
    %cst_33 = arith.constant 0.000000e+00 : f32
    %70 = vector.broadcast %cst_32 : f32 to vector<96x96xf32>
    %71 = vector.broadcast %cst_33 : f32 to vector<96x96xf32>
    %72 = arith.select %69, %70, %71 : vector<96x96xi1>, vector<96x96xf32>
    %cst_34 = arith.constant dense<0.000000e+00> : vector<96x1xf32>
    %73 = tpu.matmul %72, %68, %cst_34 {dimension_numbers = #tpu.dot_dimension_numbers<[1], [0], [0], [1], [0, 0, 1, 1], [], []>} : vector<96x96xf32>, vector<96x1xf32>, vector<96x1xf32> -> vector<96x1xf32>
    %cst_35 = arith.constant 0.0666666701 : f32
    %74 = vector.broadcast %cst_35 : f32 to vector<96x1xf32>
    %75 = arith.mulf %73, %74 : vector<96x1xf32>
    %76 = arith.subf %68, %75 : vector<96x1xf32>
    %77 = math.exp %76 : vector<96x1xf32>
    %cst_36 = arith.constant dense<0.000000e+00> : vector<96x1xf32>
    %78 = tpu.matmul %72, %77, %cst_36 {dimension_numbers = #tpu.dot_dimension_numbers<[1], [0], [0], [1], [0, 0, 1, 1], [], []>} : vector<96x96xf32>, vector<96x1xf32>, vector<96x1xf32> -> vector<96x1xf32>
    %79 = arith.divf %77, %78 : vector<96x1xf32>
    %80 = tpu.iota {dimensions = array<i32: 0>} : vector<8x96xi32>
    %81 = tpu.iota {dimensions = array<i32: 1>} : vector<8x96xi32>
    %c4_i32_37 = arith.constant 4 : i32
    %82 = vector.broadcast %c4_i32_37 : i32 to vector<8x96xi32>
    %83 = arith.shrsi %81, %82 : vector<8x96xi32>
    %84 = arith.cmpi eq, %80, %83 : vector<8x96xi32>
    %c15_i32_38 = arith.constant 15 : i32
    %85 = vector.broadcast %c15_i32_38 : i32 to vector<8x96xi32>
    %86 = arith.andi %81, %85 : vector<8x96xi32>
    %c15_i32_39 = arith.constant 15 : i32
    %87 = vector.broadcast %c15_i32_39 : i32 to vector<8x96xi32>
    %88 = arith.cmpi slt, %86, %87 : vector<8x96xi32>
    %89 = arith.andi %84, %88 : vector<8x96xi1>
    %cst_40 = arith.constant 1.000000e+00 : f32
    %cst_41 = arith.constant 0.000000e+00 : f32
    %90 = vector.broadcast %cst_40 : f32 to vector<8x96xf32>
    %91 = vector.broadcast %cst_41 : f32 to vector<8x96xf32>
    %92 = arith.select %89, %90, %91 : vector<8x96xi1>, vector<8x96xf32>
    %93 = vector.broadcast %79 : vector<96x1xf32> to vector<96x32xf32>
    %94 = arith.mulf %93, %59 : vector<96x32xf32>
    %cst_42 = arith.constant dense<0.000000e+00> : vector<8x32xf32>
    %95 = tpu.matmul %92, %94, %cst_42 {dimension_numbers = #tpu.dot_dimension_numbers<[1], [0], [0], [1], [0, 0, 1, 1], [], []>} : vector<8x96xf32>, vector<96x32xf32>, vector<8x32xf32> -> vector<8x32xf32>
    %c0_43 = arith.constant 0 : index
    %c0_44 = arith.constant 0 : index
    %c0_45 = arith.constant 0 : index
    %96 = vector.load %arg11[%c0_43, %c0_44, %c0_45] : memref<1x8x32xf32, #tpu.memory_space<vmem>>, vector<1x8x32xf32>
    %97 = vector.shape_cast %96 : vector<1x8x32xf32> to vector<8x32xf32>
    %98 = vector.shape_cast %95 : vector<8x32xf32> to vector<1x8x32xf32>
    tpu.vector_store %arg11[%c0_43, %c0_44, %c0_45], %98 {strides = array<i32>} : memref<1x8x32xf32, #tpu.memory_space<vmem>>, vector<1x8x32xf32>,
    return
  }
  func.func @transform_0(%arg0: i32) -> (i32, i32) {
    %c0_i32 = arith.constant 0 : i32
    %c0_i32_0 = arith.constant 0 : i32
    return %arg0, %c0_i32 : i32, i32
  }
  func.func @transform_1(%arg0: i32) -> (i32, i32) {
    %c0_i32 = arith.constant 0 : i32
    %c0_i32_0 = arith.constant 0 : i32
    %c0_i32_1 = arith.constant 0 : i32
    return %c0_i32, %c0_i32_0 : i32, i32
  }
  func.func @transform_2(%arg0: i32) -> (i32, i32) {
    %c0_i32 = arith.constant 0 : i32
    %c0_i32_0 = arith.constant 0 : i32
    %c0_i32_1 = arith.constant 0 : i32
    return %c0_i32, %c0_i32_0 : i32, i32
  }
  func.func @transform_3(%arg0: i32) -> (i32, i32) {
    %c0_i32 = arith.constant 0 : i32
    %c0_i32_0 = arith.constant 0 : i32
    %c0_i32_1 = arith.constant 0 : i32
    return %c0_i32, %c0_i32_0 : i32, i32
  }
  func.func @transform_4(%arg0: i32) -> (i32, i32) {
    %c0_i32 = arith.constant 0 : i32
    %c0_i32_0 = arith.constant 0 : i32
    %c0_i32_1 = arith.constant 0 : i32
    return %c0_i32, %c0_i32_0 : i32, i32
  }
  func.func @transform_5(%arg0: i32) -> (i32, i32) {
    %c0_i32 = arith.constant 0 : i32
    %c0_i32_0 = arith.constant 0 : i32
    %c0_i32_1 = arith.constant 0 : i32
    return %c0_i32, %c0_i32_0 : i32, i32
  }
  func.func @transform_6(%arg0: i32) -> (i32, i32) {
    %c0_i32 = arith.constant 0 : i32
    %c0_i32_0 = arith.constant 0 : i32
    %c0_i32_1 = arith.constant 0 : i32
    return %c0_i32, %c0_i32_0 : i32, i32
  }
  func.func @transform_7(%arg0: i32) -> (i32, i32) {
    %c0_i32 = arith.constant 0 : i32
    %c0_i32_0 = arith.constant 0 : i32
    %c0_i32_1 = arith.constant 0 : i32
    return %c0_i32, %c0_i32_0 : i32, i32
  }
  func.func @transform_8(%arg0: i32) -> (i32, i32) {
    %c0_i32 = arith.constant 0 : i32
    %c0_i32_0 = arith.constant 0 : i32
    %c0_i32_1 = arith.constant 0 : i32
    return %c0_i32, %c0_i32_0 : i32, i32
  }
  func.func @transform_9(%arg0: i32) -> (i32, i32) {
    %c0_i32 = arith.constant 0 : i32
    %c0_i32_0 = arith.constant 0 : i32
    %c0_i32_1 = arith.constant 0 : i32
    return %c0_i32, %c0_i32_0 : i32, i32
  }
  func.func @transform_10(%arg0: i32) -> (i32, i32, i32) {
    %c0_i32 = arith.constant 0 : i32
    %c0_i32_0 = arith.constant 0 : i32
    %c0_i32_1 = arith.constant 0 : i32
    return %arg0, %c0_i32, %c0_i32_0 : i32, i32, i32
  }
}

</mosaic_0001>

<llo_original>
// kernel: gca_forward.1
$region0: #{gca_forward.1}
  #allocation0 [shape = 'u32[]', space=smem, size = 0x4, offset = 0x4, fixed_abs, tag = 'smem constant byte address 0x4 - core index']
  #allocation1 [shape = 'u32[72,128]{1,0:T(1,128)}', space=vmem, size = 0x9000, scoped, tag = 'internal scratch']
  %s0 = inlined_call_operand.vmem [shape: bf16[192,48], index: 0, kind: input, shape index: {}]
  %s1 = inlined_call_operand.vmem [shape: bf16[48,32], index: 1, kind: input, shape index: {}]
  %s2 = inlined_call_operand.vmem [shape: f32[1,32], index: 2, kind: input, shape index: {}]
  %s3 = inlined_call_operand.vmem [shape: bf16[32,64], index: 3, kind: input, shape index: {}]
  %s4 = inlined_call_operand.vmem [shape: f32[1,64], index: 4, kind: input, shape index: {}]
  %s5 = inlined_call_operand.vmem [shape: bf16[64,32], index: 5, kind: input, shape index: {}]
  %s6 = inlined_call_operand.vmem [shape: f32[1,32], index: 6, kind: input, shape index: {}]
  %s7 = inlined_call_operand.vmem [shape: bf16[32,32], index: 7, kind: input, shape index: {}]
  %s8 = inlined_call_operand.vmem [shape: f32[1,32], index: 8, kind: input, shape index: {}]
  %s9 = inlined_call_operand.vmem [shape: f32[32,1], index: 9, kind: input, shape index: {}]
  %s10 = inlined_call_operand.vmem [shape: f32[2,8,32], index: 10, kind: output, shape index: {}]
  %s11 = sld [smem:[#allocation0]]
  $region73: #{gca_forward.1} parent=0
    _
  %s13 = ssub.s32 1, %s11
  %s14 = scalar_select 0, %s13, %s11
  loop: start=0, step=1, limit=4
  $region2: #{gca_forward.1} parent=0 // loop_pre_header
    _
  $region3: #{gca_forward.1} parent=0 // loop_header
    %s16 = sphi 0, %s20
    %p17 = scmp.ge.s32.totalorder %s16, 4
    %s26 = sphi 0, %s28
    %s29 = sphi 0, %s26
    %s30 = sphi 0, %s29
    %s46 = sphi 0, %s30
    %s50 = sphi 0, %s50
    %s52 = sphi 0, %s50
    %s53 = sphi 0, %s52
    %s67 = sphi 0, %s53
    %s71 = sphi 0, %s71
    %s73 = sphi 0, %s71
    %s74 = sphi 0, %s73
    %s88 = sphi 0, %s74
    %s92 = sphi 0, %s92
    %s94 = sphi 0, %s92
    %s95 = sphi 0, %s94
    %s109 = sphi 0, %s95
    %s113 = sphi 0, %s113
    %s115 = sphi 0, %s113
    %s116 = sphi 0, %s115
    %s130 = sphi 0, %s116
    %s134 = sphi 0, %s134
    %s136 = sphi 0, %s134
    %s137 = sphi 0, %s136
    %s151 = sphi 0, %s137
    %s155 = sphi 0, %s155
    %s157 = sphi 0, %s155
    %s158 = sphi 0, %s157
    %s172 = sphi 0, %s158
    %s176 = sphi 0, %s176
    %s178 = sphi 0, %s176
    %s179 = sphi 0, %s178
    %s193 = sphi 0, %s179
    %s197 = sphi 0, %s197
    %s199 = sphi 0, %s197
    %s200 = sphi 0, %s199
    %s214 = sphi 0, %s200
    %s218 = sphi 0, %s218
    %s220 = sphi 0, %s218
    %s221 = sphi 0, %s220
    %s235 = sphi 0, %s221
    %s241 = sphi 0, %s243
    %s244 = sphi 0, %s241
    %s245 = sphi 0, %s244
    %s261 = sphi 0, %s245
  $region4: #{gca_forward.1} parent=0 // loop_header_branch
    %19 = sbr.rel (%p17) target = $region8
  $region5: #{gca_forward.1} parent=0 // loop_body
    %s21 = ssub.s32 %s16, 1
    %s22 = ssub.s32 %s16, 2
    %s23 = sadd.s32 %s16, 1
    %s24 = ssub.s32 %s16, %s23
    %p25 = scmp.eq.s32.totalorder %s24, 0
    %s27 = sadd.s32 %s26, 1
    %s28 = scalar_select %p25, %s26, %s27
    %p31 = pneg %p25
    %p32 = scmp.eq.s32.totalorder %s16, 1
    %p33 = por %p31, %p32
    %p34 = scmp.ne.s32.totalorder %s26, %s29
    %p35 = scmp.eq.s32.totalorder %s16, 0
    %p36 = por %p34, %p35
    %p37 = scmp.ne.s32.totalorder %s26, %s29
    %p38 = scmp.eq.s32.totalorder %s21, 1
    %p39 = por %p37, %p38
    %p40 = scmp.ne.s32.totalorder %s29, %s30
    %p41 = scmp.eq.s32.totalorder %s21, 0
    %p42 = por %p40, %p41
    %p43 = scmp.ne.s32.totalorder %s29, %s30
    %p44 = scmp.eq.s32.totalorder %s22, 1
    %p45 = por %p43, %p44
    %p47 = scmp.ne.s32.totalorder %s30, %s46
    %p48 = scmp.eq.s32.totalorder %s22, 0
    %p49 = por %p47, %p48
    %s51 = sadd.s32 %s50, 1
    %p54 = scmp.eq.s32.totalorder %s16, 1
    %p55 = scmp.ne.s32.totalorder %s50, %s52
    %p56 = scmp.eq.s32.totalorder %s16, 0
    %p57 = por %p55, %p56
    %p58 = scmp.ne.s32.totalorder %s50, %s52
    %p59 = scmp.eq.s32.totalorder %s21, 1
    %p60 = por %p58, %p59
    %p61 = scmp.ne.s32.totalorder %s52, %s53
    %p62 = scmp.eq.s32.totalorder %s21, 0
    %p63 = por %p61, %p62
    %p64 = scmp.ne.s32.totalorder %s52, %s53
    %p65 = scmp.eq.s32.totalorder %s22, 1
    %p66 = por %p64, %p65
    %p68 = scmp.ne.s32.totalorder %s53, %s67
    %p69 = scmp.eq.s32.totalorder %s22, 0
    %p70 = por %p68, %p69
    %s72 = sadd.s32 %s71, 1
    %p75 = scmp.eq.s32.totalorder %s16, 1
    %p76 = scmp.ne.s32.totalorder %s71, %s73
    %p77 = scmp.eq.s32.totalorder %s16, 0
    %p78 = por %p76, %p77
    %p79 = scmp.ne.s32.totalorder %s71, %s73
    %p80 = scmp.eq.s32.totalorder %s21, 1
    %p81 = por %p79, %p80
    %p82 = scmp.ne.s32.totalorder %s73, %s74
    %p83 = scmp.eq.s32.totalorder %s21, 0
    %p84 = por %p82, %p83
    %p85 = scmp.ne.s32.totalorder %s73, %s74
    %p86 = scmp.eq.s32.totalorder %s22, 1
    %p87 = por %p85, %p86
    %p89 = scmp.ne.s32.totalorder %s74, %s88
    %p90 = scmp.eq.s32.totalorder %s22, 0
    %p91 = por %p89, %p90
    %s93 = sadd.s32 %s92, 1
    %p96 = scmp.eq.s32.totalorder %s16, 1
    %p97 = scmp.ne.s32.totalorder %s92, %s94
    %p98 = scmp.eq.s32.totalorder %s16, 0
    %p99 = por %p97, %p98
    %p100 = scmp.ne.s32.totalorder %s92, %s94
    %p101 = scmp.eq.s32.totalorder %s21, 1
    %p102 = por %p100, %p101
    %p103 = scmp.ne.s32.totalorder %s94, %s95
    %p104 = scmp.eq.s32.totalorder %s21, 0
    %p105 = por %p103, %p104
    %p106 = scmp.ne.s32.totalorder %s94, %s95
    %p107 = scmp.eq.s32.totalorder %s22, 1
    %p108 = por %p106, %p107
    %p110 = scmp.ne.s32.totalorder %s95, %s109
    %p111 = scmp.eq.s32.totalorder %s22, 0
    %p112 = por %p110, %p111
    %s114 = sadd.s32 %s113, 1
    %p117 = scmp.eq.s32.totalorder %s16, 1
    %p118 = scmp.ne.s32.totalorder %s113, %s115
    %p119 = scmp.eq.s32.totalorder %s16, 0
    %p120 = por %p118, %p119
    %p121 = scmp.ne.s32.totalorder %s113, %s115
    %p122 = scmp.eq.s32.totalorder %s21, 1
    %p123 = por %p121, %p122
    %p124 = scmp.ne.s32.totalorder %s115, %s116
    %p125 = scmp.eq.s32.totalorder %s21, 0
    %p126 = por %p124, %p125
    %p127 = scmp.ne.s32.totalorder %s115, %s116
    %p128 = scmp.eq.s32.totalorder %s22, 1
    %p129 = por %p127, %p128
    %p131 = scmp.ne.s32.totalorder %s116, %s130
    %p132 = scmp.eq.s32.totalorder %s22, 0
    %p133 = por %p131, %p132
    %s135 = sadd.s32 %s134, 1
    %p138 = scmp.eq.s32.totalorder %s16, 1
    %p139 = scmp.ne.s32.totalorder %s134, %s136
    %p140 = scmp.eq.s32.totalorder %s16, 0
    %p141 = por %p139, %p140
    %p142 = scmp.ne.s32.totalorder %s134, %s136
    %p143 = scmp.eq.s32.totalorder %s21, 1
    %p144 = por %p142, %p143
    %p145 = scmp.ne.s32.totalorder %s136, %s137
    %p146 = scmp.eq.s32.totalorder %s21, 0
    %p147 = por %p145, %p146
    %p148 = scmp.ne.s32.totalorder %s136, %s137
    %p149 = scmp.eq.s32.totalorder %s22, 1
    %p150 = por %p148, %p149
    %p152 = scmp.ne.s32.totalorder %s137, %s151
    %p153 = scmp.eq.s32.totalorder %s22, 0
    %p154 = por %p152, %p153
    %s156 = sadd.s32 %s155, 1
    %p159 = scmp.eq.s32.totalorder %s16, 1
    %p160 = scmp.ne.s32.totalorder %s155, %s157
    %p161 = scmp.eq.s32.totalorder %s16, 0
    %p162 = por %p160, %p161
    %p163 = scmp.ne.s32.totalorder %s155, %s157
    %p164 = scmp.eq.s32.totalorder %s21, 1
    %p165 = por %p163, %p164
    %p166 = scmp.ne.s32.totalorder %s157, %s158
    %p167 = scmp.eq.s32.totalorder %s21, 0
    %p168 = por %p166, %p167
    %p169 = scmp.ne.s32.totalorder %s157, %s158
    %p170 = scmp.eq.s32.totalorder %s22, 1
    %p171 = por %p169, %p170
    %p173 = scmp.ne.s32.totalorder %s158, %s172
    %p174 = scmp.eq.s32.totalorder %s22, 0
    %p175 = por %p173, %p174
    %s177 = sadd.s32 %s176, 1
    %p180 = scmp.eq.s32.totalorder %s16, 1
    %p181 = scmp.ne.s32.totalorder %s176, %s178
    %p182 = scmp.eq.s32.totalorder %s16, 0
    %p183 = por %p181, %p182
    %p184 = scmp.ne.s32.totalorder %s176, %s178
    %p185 = scmp.eq.s32.totalorder %s21, 1
    %p186 = por %p184, %p185
    %p187 = scmp.ne.s32.totalorder %s178, %s179
    %p188 = scmp.eq.s32.totalorder %s21, 0
    %p189 = por %p187, %p188
    %p190 = scmp.ne.s32.totalorder %s178, %s179
    %p191 = scmp.eq.s32.totalorder %s22, 1
    %p192 = por %p190, %p191
    %p194 = scmp.ne.s32.totalorder %s179, %s193
    %p195 = scmp.eq.s32.totalorder %s22, 0
    %p196 = por %p194, %p195
    %s198 = sadd.s32 %s197, 1
    %p201 = scmp.eq.s32.totalorder %s16, 1
    %p202 = scmp.ne.s32.totalorder %s197, %s199
    %p203 = scmp.eq.s32.totalorder %s16, 0
    %p204 = por %p202, %p203
    %p205 = scmp.ne.s32.totalorder %s197, %s199
    %p206 = scmp.eq.s32.totalorder %s21, 1
    %p207 = por %p205, %p206
    %p208 = scmp.ne.s32.totalorder %s199, %s200
    %p209 = scmp.eq.s32.totalorder %s21, 0
    %p210 = por %p208, %p209
    %p211 = scmp.ne.s32.totalorder %s199, %s200
    %p212 = scmp.eq.s32.totalorder %s22, 1
    %p213 = por %p211, %p212
    %p215 = scmp.ne.s32.totalorder %s200, %s214
    %p216 = scmp.eq.s32.totalorder %s22, 0
    %p217 = por %p215, %p216
    %s219 = sadd.s32 %s218, 1
    %p222 = scmp.eq.s32.totalorder %s16, 1
    %p223 = scmp.ne.s32.totalorder %s218, %s220
    %p224 = scmp.eq.s32.totalorder %s16, 0
    %p225 = por %p223, %p224
    %p226 = scmp.ne.s32.totalorder %s218, %s220
    %p227 = scmp.eq.s32.totalorder %s21, 1
    %p228 = por %p226, %p227
    %p229 = scmp.ne.s32.totalorder %s220, %s221
    %p230 = scmp.eq.s32.totalorder %s21, 0
    %p231 = por %p229, %p230
    %p232 = scmp.ne.s32.totalorder %s220, %s221
    %p233 = scmp.eq.s32.totalorder %s22, 1
    %p234 = por %p232, %p233
    %p236 = scmp.ne.s32.totalorder %s221, %s235
    %p237 = scmp.eq.s32.totalorder %s22, 0
    %p238 = por %p236, %p237
    %s239 = ssub.s32 %s16, %s23
    %p240 = scmp.eq.s32.totalorder %s239, 0
    %s242 = sadd.s32 %s241, 1
    %s243 = scalar_select %p240, %s241, %s242
    %p246 = pneg %p240
    %p247 = scmp.eq.s32.totalorder %s16, 1
    %p248 = por %p246, %p247
    %p249 = scmp.ne.s32.totalorder %s241, %s244
    %p250 = scmp.eq.s32.totalorder %s16, 0
    %p251 = por %p249, %p250
    %p252 = scmp.ne.s32.totalorder %s241, %s244
    %p253 = scmp.eq.s32.totalorder %s21, 1
    %p254 = por %p252, %p253
    %p255 = scmp.ne.s32.totalorder %s244, %s245
    %p256 = scmp.eq.s32.totalorder %s21, 0
    %p257 = por %p255, %p256
    %p258 = scmp.ne.s32.totalorder %s244, %s245
    %p259 = scmp.eq.s32.totalorder %s22, 1
    %p260 = por %p258, %p259
    %p262 = scmp.ne.s32.totalorder %s245, %s261
    %p263 = scmp.eq.s32.totalorder %s22, 0
    %p264 = por %p262, %p263
    %p265 = scmp.le.s32.totalorder 1, %s16
    %p266 = scmp.lt.s32.totalorder %s16, 3
    %p267 = pnand %p265, %p266
    %p268 = pneg %p267
    // Predicated region
    $region9: #{gca_forward.1} parent=5 // pred_check
      _
    $region10: #{gca_forward.1} parent=5 // pred_check_branch
      %270 = sbr.rel (%p267) target = $region12
    $region11: #{gca_forward.1} parent=5 // pred_region
      %s271 = ssub.s32 %s16, 1
      // Predicated region
      $region13: #{gca_forward.1} parent=11 // pred_check
        %p272 = pneg %p63
      $region14: #{gca_forward.1} parent=11 // pred_check_branch
        %274 = sbr.rel (%p272) target = $region16
      $region15: #{gca_forward.1} parent=11 // pred_region
        _
      $region16: #{gca_forward.1} parent=11 // pred_fallthru
        _
      // Predicated region
      $region17: #{gca_forward.1} parent=11 // pred_check
        %p275 = pneg %p84
      $region18: #{gca_forward.1} parent=11 // pred_check_branch
        %277 = sbr.rel (%p275) target = $region20
      $region19: #{gca_forward.1} parent=11 // pred_region
        _
      $region20: #{gca_forward.1} parent=11 // pred_fallthru
        _
      // Predicated region
      $region21: #{gca_forward.1} parent=11 // pred_check
        %p278 = pneg %p105
      $region22: #{gca_forward.1} parent=11 // pred_check_branch
        %280 = sbr.rel (%p278) target = $region24
      $region23: #{gca_forward.1} parent=11 // pred_region
        _
      $region24: #{gca_forward.1} parent=11 // pred_fallthru
        _
      // Predicated region
      $region25: #{gca_forward.1} parent=11 // pred_check
        %p281 = pneg %p126
      $region26: #{gca_forward.1} parent=11 // pred_check_branch
        %283 = sbr.rel (%p281) target = $region28
      $region27: #{gca_forward.1} parent=11 // pred_region
        _
      $region28: #{gca_forward.1} parent=11 // pred_fallthru
        _
      // Predicated region
      $region29: #{gca_forward.1} parent=11 // pred_check
        %p284 = pneg %p147
      $region30: #{gca_forward.1} parent=11 // pred_check_branch
        %286 = sbr.rel (%p284) target = $region32
      $region31: #{gca_forward.1} parent=11 // pred_region
        _
      $region32: #{gca_forward.1} parent=11 // pred_fallthru
        _
      // Predicated region
      $region33: #{gca_forward.1} parent=11 // pred_check
        %p287 = pneg %p168
      $region34: #{gca_forward.1} parent=11 // pred_check_branch
        %289 = sbr.rel (%p287) target = $region36
      $region35: #{gca_forward.1} parent=11 // pred_region
        _
      $region36: #{gca_forward.1} parent=11 // pred_fallthru
        _
      // Predicated region
      $region37: #{gca_forward.1} parent=11 // pred_check
        %p290 = pneg %p189
      $region38: #{gca_forward.1} parent=11 // pred_check_branch
        %292 = sbr.rel (%p290) target = $region40
      $region39: #{gca_forward.1} parent=11 // pred_region
        _
      $region40: #{gca_forward.1} parent=11 // pred_fallthru
        _
      // Predicated region
      $region41: #{gca_forward.1} parent=11 // pred_check
        %p293 = pneg %p210
      $region42: #{gca_forward.1} parent=11 // pred_check_branch
        %295 = sbr.rel (%p293) target = $region44
      $region43: #{gca_forward.1} parent=11 // pred_region
        _
      $region44: #{gca_forward.1} parent=11 // pred_fallthru
        _
      // Predicated region
      $region45: #{gca_forward.1} parent=11 // pred_check
        %p296 = pneg %p231
      $region46: #{gca_forward.1} parent=11 // pred_check_branch
        %298 = sbr.rel (%p296) target = $region48
      $region47: #{gca_forward.1} parent=11 // pred_region
        _
      $region48: #{gca_forward.1} parent=11 // pred_fallthru
        _
    $region12: #{gca_forward.1} parent=5 // pred_fallthru
      _
    %p299 = scmp.lt.s32.totalorder %s16, 2
    // Predicated region
    $region49: #{gca_forward.1} parent=5 // pred_check
      %p300 = pneg %p299
    $region50: #{gca_forward.1} parent=5 // pred_check_branch
      %302 = sbr.rel (%p300) target = $region52
    $region51: #{gca_forward.1} parent=5 // pred_region
      // Predicated region
      $region53: #{gca_forward.1} parent=51 // pred_check
        %p303 = pneg %p36
      $region54: #{gca_forward.1} parent=51 // pred_check_branch
        %305 = sbr.rel (%p303) target = $region56
      $region55: #{gca_forward.1} parent=51 // pred_region
        %s306 = smul.u32 12, %s16
        %p307 = scmp.lt.s32.totalorder %s306, 23
        %s308 = scalar_select %p307, %s306, 23
        %s309 = smul.addr %s308, 4
        %s310 = scalar_lea.vmem %s0, %s309
        %s311 = smul.u32 12, %s16
      $region56: #{gca_forward.1} parent=51 // pred_fallthru
        _
    $region52: #{gca_forward.1} parent=5 // pred_fallthru
      _
    %p312 = scmp.le.s32.totalorder 1, %s16
    %p313 = scmp.lt.s32.totalorder %s16, 3
    %p314 = pnand %p312, %p313
    %p315 = pneg %p314
    // Predicated region
    $region57: #{gca_forward.1} parent=5 // pred_check
      _
    $region58: #{gca_forward.1} parent=5 // pred_check_branch
      %317 = sbr.rel (%p314) target = $region60
    $region59: #{gca_forward.1} parent=5 // pred_region
      %s318 = ssub.s32 %s16, 1
      %s319 = smul.u32 12, %s21
      %p320 = scmp.lt.s32.totalorder %s319, 23
      %s321 = scalar_select %p320, %s319, 23
      %s322 = smul.addr %s321, 4
      %s323 = scalar_lea.vmem %s0, %s322
      %p324 = pneg %p42
      %p325 = pneg %p39
      %p326 = pneg %p63
      %p327 = pneg %p60
      %p328 = pneg %p84
      %p329 = pneg %p81
      %p330 = pneg %p105
      %p331 = pneg %p102
      %p332 = pneg %p126
      %p333 = pneg %p123
      %p334 = pneg %p147
      %p335 = pneg %p144
      %p336 = pneg %p168
      %p337 = pneg %p165
      %p338 = pneg %p189
      %p339 = pneg %p186
      %p340 = pneg %p210
      %p341 = pneg %p207
      %p342 = pneg %p231
      %p343 = pneg %p228
      %p344 = pneg %p257
      %p345 = pneg %p254
      %p346 = scmp.lt.s32.totalorder %s21, 1
      %s347 = scalar_select %p346, %s21, 1
      %s348 = smul.addr %s347, 8
      %s349 = scalar_lea.vmem %s10, %s348
      %s350 = smul.u32 12, %s21
      %p351 = scmp.lt.s32.totalorder %s350, 23
      %s352 = scalar_select %p351, %s350, 23
      %s353 = smul.addr %s352, 4
      %s354 = scalar_lea.vmem %s0, %s353
      %s355 = smul.u32 12, %s21
      %p356 = scmp.lt.s32.totalorder %s21, 1
      %s357 = scalar_select %p356, %s21, 1
      %s358 = smul.addr %s357, 8
      %s359 = scalar_lea.vmem %s10, %s358
      %v361 = vld [vmem:[%s354] sm:$0xf]
      %v362 = vld [vmem:[%s354 + $0x4] sm:$0xf]
      %v363 = vld [vmem:[%s354 + $0x8] sm:$0xf]
      %v364 = vld [vmem:[%s354 + $0xc] sm:$0xf]
      %v365 = vld [vmem:[%s354 + $0x10] sm:$0xf]
      %v366 = vld [vmem:[%s354 + $0x14] sm:$0xf]
      %v367 = vld [vmem:[%s354 + $0x18] sm:$0xf]
      %v368 = vld [vmem:[%s354 + $0x1c] sm:$0xf]
      %v369 = vld [vmem:[%s354 + $0x20] sm:$0xf]
      %v370 = vld [vmem:[%s354 + $0x24] sm:$0xf]
      %v371 = vld [vmem:[%s354 + $0x28] sm:$0xf]
      %v372 = vld [vmem:[%s354 + $0x2c] sm:$0xf]
      %v373 = vld [vmem:[%s1] sm:$0xf]
      %v374 = vld [vmem:[%s1 + $0x4] sm:$0xf]
      %v375 = vld [vmem:[%s1 + $0x8] sm:$0xf]
      %v376 = vld [vmem:[%s1 + $0xc] sm:$0xf]
      %v377 = vld [vmem:[%s1 + $0x10] sm:$0xf]
      %v378 = vld [vmem:[%s1 + $0x14] sm:$0xf]
      %v379 = vld [vmem:[%s2] sm:$0x1]
      %v381 = vperm.slane %v379, 0
      %v395 = vunpack.c.l.b16 %v361
      %v396 = vunpack.c.l.b16 %v362
      %v397 = vunpack.c.l.b16 %v363
      %v398 = vunpack.c.l.b16 %v364
      %v399 = vunpack.c.l.b16 %v365
      %v400 = vunpack.c.l.b16 %v366
      %v401 = vunpack.c.l.b16 %v367
      %v402 = vunpack.c.l.b16 %v368
      %v403 = vunpack.c.l.b16 %v369
      %v404 = vunpack.c.l.b16 %v370
      %v405 = vunpack.c.l.b16 %v371
      %v406 = vunpack.c.l.b16 %v372
      %v407 = vpack.c.b16 %v396, %v395
      %v408 = vpack.c.b16 %v398, %v397
      %v409 = vpack.c.b16 %v400, %v399
      %v410 = vpack.c.b16 %v402, %v401
      %v411 = vpack.c.b16 %v404, %v403
      %v412 = vpack.c.b16 %v406, %v405
      %v419 = vunpack.c.l.b16 %v373
      %v420 = vunpack.c.l.b16 %v374
      %v421 = vunpack.c.l.b16 %v375
      %v422 = vunpack.c.l.b16 %v376
      %v423 = vunpack.c.l.b16 %v377
      %v424 = vunpack.c.l.b16 %v378
      %v425 = vpack.c.b16 %v420, %v419
      %v426 = vpack.c.b16 %v422, %v421
      %v427 = vpack.c.b16 %v424, %v423
      %vm431 = vcmask 392192
      %v433 = vsel %vm431, %v407, 0
      %v436 = vsel %vm431, %v408, 0
      %v439 = vsel %vm431, %v409, 0
      %v442 = vsel %vm431, %v410, 0
      %v445 = vsel %vm431, %v411, 0
      %v448 = vsel %vm431, %v412, 0
      %450 = vmatpush.bf16.msra.mxu0 0
      %451 = vmatpush.bf16.msra.mxu0 0
      %452 = vmatpush.bf16.msra.mxu0 0
      %453 = vmatpush.bf16.msra.mxu0 0
      %454 = vmatpush.bf16.msra.mxu0 0
      %455 = vmatpush.bf16.msra.mxu0 %v427
      %456 = vmatpush.bf16.msra.mxu0 %v426
      %457 = vmatpush.bf16.msra.mxu0 %v425
      %458 = vmatmul.bf16.gmra.mxu0 %v433
      %v459 = vpop.f32.mrf.mxu0
      %v460 = vadd.f32 %v381, %v459
      %v461 = vpop.f32.mrf.mxu0
      %v462 = vadd.f32 %v381, %v461
      %463 = vmatmul.bf16.gmra.mxu0 %v436
      %v464 = vpop.f32.mrf.mxu0
      %v465 = vadd.f32 %v381, %v464
      %v466 = vpop.f32.mrf.mxu0
      %v467 = vadd.f32 %v381, %v466
      %468 = vmatmul.bf16.gmra.mxu0 %v439
      %v469 = vpop.f32.mrf.mxu0
      %v470 = vadd.f32 %v381, %v469
      %v471 = vpop.f32.mrf.mxu0
      %v472 = vadd.f32 %v381, %v471
      %473 = vmatmul.bf16.gmra.mxu0 %v442
      %v474 = vpop.f32.mrf.mxu0
      %v475 = vadd.f32 %v381, %v474
      %v476 = vpop.f32.mrf.mxu0
      %v477 = vadd.f32 %v381, %v476
      %478 = vmatmul.bf16.gmra.mxu0 %v445
      %v479 = vpop.f32.mrf.mxu0
      %v480 = vadd.f32 %v381, %v479
      %v481 = vpop.f32.mrf.mxu0
      %v482 = vadd.f32 %v381, %v481
      %483 = vmatmul.bf16.gmra.mxu0 %v448
      %v484 = vpop.f32.mrf.mxu0
      %v485 = vadd.f32 %v381, %v484
      %v486 = vpop.f32.mrf.mxu0
      %v487 = vadd.f32 %v381, %v486
      %488 = vdwg.mxu0
      %v489 = vmax.f32 %v460, 0.0
      %v490 = vmax.f32 %v462, 0.0
      %v491 = vmax.f32 %v465, 0.0
      %v492 = vmax.f32 %v467, 0.0
      %v493 = vmax.f32 %v470, 0.0
      %v494 = vmax.f32 %v472, 0.0
      %v495 = vmax.f32 %v475, 0.0
      %v496 = vmax.f32 %v477, 0.0
      %v497 = vmax.f32 %v480, 0.0
      %v498 = vmax.f32 %v482, 0.0
      %v499 = vmax.f32 %v485, 0.0
      %v500 = vmax.f32 %v487, 0.0
      %v501 = vpack.c.bf16 %v490, %v489
      %v502 = vpack.c.bf16 %v492, %v491
      %v503 = vpack.c.bf16 %v494, %v493
      %v504 = vpack.c.bf16 %v496, %v495
      %v505 = vpack.c.bf16 %v498, %v497
      %v506 = vpack.c.bf16 %v500, %v499
      %v507 = vld [vmem:[%s3] sm:$0xf]
      %v508 = vld [vmem:[%s3 + $0x4] sm:$0xf]
      %v509 = vld [vmem:[%s3 + $0x8] sm:$0xf]
      %v510 = vld [vmem:[%s3 + $0xc] sm:$0xf]
      %v511 = vld [vmem:[%s4] sm:$0x1]
      %v513 = vperm.slane %v511, 0
      %v519 = vunpack.c.l.b16 %v507
      %v520 = vunpack.c.l.b16 %v508
      %v521 = vunpack.c.l.b16 %v509
      %v522 = vunpack.c.l.b16 %v510
      %v523 = vpack.c.b16 %v520, %v519
      %v524 = vpack.c.b16 %v522, %v521
      %vm527 = vcmask 261120
      %v529 = vsel %vm527, %v501, 0
      %v532 = vsel %vm527, %v502, 0
      %v535 = vsel %vm527, %v503, 0
      %v538 = vsel %vm527, %v504, 0
      %v541 = vsel %vm527, %v505, 0
      %v544 = vsel %vm527, %v506, 0
      %546 = vmatpush.bf16.msra.mxu0 0
      %547 = vmatpush.bf16.msra.mxu0 0
      %548 = vmatpush.bf16.msra.mxu0 0
      %549 = vmatpush.bf16.msra.mxu0 0
      %550 = vmatpush.bf16.msra.mxu0 0
      %551 = vmatpush.bf16.msra.mxu0 0
      %552 = vmatpush.bf16.msra.mxu0 %v524
      %553 = vmatpush.bf16.msra.mxu0 %v523
      %554 = vmatmul.bf16.gmra.mxu0 %v529
      %v555 = vpop.f32.mrf.mxu0
      %v556 = vadd.f32 %v513, %v555
      %v557 = vpop.f32.mrf.mxu0
      %v558 = vadd.f32 %v513, %v557
      %559 = vmatmul.bf16.gmra.mxu0 %v532
      %v560 = vpop.f32.mrf.mxu0
      %v561 = vadd.f32 %v513, %v560
      %v562 = vpop.f32.mrf.mxu0
      %v563 = vadd.f32 %v513, %v562
      %564 = vmatmul.bf16.gmra.mxu0 %v535
      %v565 = vpop.f32.mrf.mxu0
      %v566 = vadd.f32 %v513, %v565
      %v567 = vpop.f32.mrf.mxu0
      %v568 = vadd.f32 %v513, %v567
      %569 = vmatmul.bf16.gmra.mxu0 %v538
      %v570 = vpop.f32.mrf.mxu0
      %v571 = vadd.f32 %v513, %v570
      %v572 = vpop.f32.mrf.mxu0
      %v573 = vadd.f32 %v513, %v572
      %574 = vmatmul.bf16.gmra.mxu0 %v541
      %v575 = vpop.f32.mrf.mxu0
      %v576 = vadd.f32 %v513, %v575
      %v577 = vpop.f32.mrf.mxu0
      %v578 = vadd.f32 %v513, %v577
      %579 = vmatmul.bf16.gmra.mxu0 %v544
      %v580 = vpop.f32.mrf.mxu0
      %v581 = vadd.f32 %v513, %v580
      %v582 = vpop.f32.mrf.mxu0
      %v583 = vadd.f32 %v513, %v582
      %584 = vdwg.mxu0
      %597 = vrot.lane.b32.xlu0 %v556, 96
      %v598 = vpop.permute.xlu0 %597
      %599 = vrot.lane.b32.xlu0 %v558, 96
      %v600 = vpop.permute.xlu0 %599
      %601 = vrot.lane.b32.xlu0 %v561, 96
      %v602 = vpop.permute.xlu0 %601
      %603 = vrot.lane.b32.xlu0 %v563, 96
      %v604 = vpop.permute.xlu0 %603
      %605 = vrot.lane.b32.xlu0 %v566, 96
      %v606 = vpop.permute.xlu0 %605
      %607 = vrot.lane.b32.xlu0 %v568, 96
      %v608 = vpop.permute.xlu0 %607
      %609 = vrot.lane.b32.xlu0 %v571, 96
      %v610 = vpop.permute.xlu0 %609
      %611 = vrot.lane.b32.xlu0 %v573, 96
      %v612 = vpop.permute.xlu0 %611
      %613 = vrot.lane.b32.xlu0 %v576, 96
      %v614 = vpop.permute.xlu0 %613
      %615 = vrot.lane.b32.xlu0 %v578, 96
      %v616 = vpop.permute.xlu0 %615
      %617 = vrot.lane.b32.xlu0 %v581, 96
      %v618 = vpop.permute.xlu0 %617
      %619 = vrot.lane.b32.xlu0 %v583, 96
      %v620 = vpop.permute.xlu0 %619
      %v633 = vpack.c.bf16 %v558, %v556
      %v634 = vpack.c.bf16 %v563, %v561
      %v635 = vpack.c.bf16 %v568, %v566
      %v636 = vpack.c.bf16 %v573, %v571
      %v637 = vpack.c.bf16 %v578, %v576
      %v638 = vpack.c.bf16 %v583, %v581
      %v639 = vpack.c.bf16 %v600, %v598
      %v640 = vpack.c.bf16 %v604, %v602
      %v641 = vpack.c.bf16 %v608, %v606
      %v642 = vpack.c.bf16 %v612, %v610
      %v643 = vpack.c.bf16 %v616, %v614
      %v644 = vpack.c.bf16 %v620, %v618
      %v645 = vlaneseq
      %v646 = vshrl.u32 %v645, 7
      %v647 = vadd.s32 %v646, 8
      %v648 = vadd.s32 %v646, 16
      %v649 = vadd.s32 %v646, 24
      %v650 = vadd.s32 %v646, 32
      %v651 = vadd.s32 %v646, 40
      %v652 = vadd.s32 %v646, 48
      %v653 = vadd.s32 %v646, 56
      %v654 = vadd.s32 %v646, 64
      %v655 = vadd.s32 %v646, 72
      %v656 = vadd.s32 %v646, 80
      %v657 = vadd.s32 %v646, 88
      %v658 = vadd.s32 %v646, 96
      %v659 = vadd.s32 %v646, 104
      %v660 = vadd.s32 %v646, 112
      %v661 = vadd.s32 %v646, 120
      %v662 = vadd.s32 %v646, 128
      %v663 = vadd.s32 %v646, 136
      %v664 = vadd.s32 %v646, 144
      %v665 = vadd.s32 %v646, 152
      %v666 = vadd.s32 %v646, 160
      %v667 = vadd.s32 %v646, 168
      %v668 = vadd.s32 %v646, 176
      %v669 = vadd.s32 %v646, 184
      %v670 = vlaneseq
      %v671 = vand.u32 %v670, 127
      %v672 = vshra.s32 %v646, 4
      %v673 = vshra.s32 %v647, 4
      %v674 = vshra.s32 %v648, 4
      %v675 = vshra.s32 %v649, 4
      %v676 = vshra.s32 %v650, 4
      %v677 = vshra.s32 %v651, 4
      %v678 = vshra.s32 %v652, 4
      %v679 = vshra.s32 %v653, 4
      %v680 = vshra.s32 %v654, 4
      %v681 = vshra.s32 %v655, 4
      %v682 = vshra.s32 %v656, 4
      %v683 = vshra.s32 %v657, 4
      %v684 = vshra.s32 %v658, 4
      %v685 = vshra.s32 %v659, 4
      %v686 = vshra.s32 %v660, 4
      %v687 = vshra.s32 %v661, 4
      %v688 = vshra.s32 %v662, 4
      %v689 = vshra.s32 %v663, 4
      %v690 = vshra.s32 %v664, 4
      %v691 = vshra.s32 %v665, 4
      %v692 = vshra.s32 %v666, 4
      %v693 = vshra.s32 %v667, 4
      %v694 = vshra.s32 %v668, 4
      %v695 = vshra.s32 %v669, 4
      %v696 = vshra.s32 %v671, 4
      %vm697 = vcmp.eq.s32.totalorder %v672, %v696
      %vm698 = vcmp.eq.s32.totalorder %v673, %v696
      %vm699 = vcmp.eq.s32.totalorder %v674, %v696
      %vm700 = vcmp.eq.s32.totalorder %v675, %v696
      %vm701 = vcmp.eq.s32.totalorder %v676, %v696
      %vm702 = vcmp.eq.s32.totalorder %v677, %v696
      %vm703 = vcmp.eq.s32.totalorder %v678, %v696
      %vm704 = vcmp.eq.s32.totalorder %v679, %v696
      %vm705 = vcmp.eq.s32.totalorder %v680, %v696
      %vm706 = vcmp.eq.s32.totalorder %v681, %v696
      %vm707 = vcmp.eq.s32.totalorder %v682, %v696
      %vm708 = vcmp.eq.s32.totalorder %v683, %v696
      %vm709 = vcmp.eq.s32.totalorder %v684, %v696
      %vm710 = vcmp.eq.s32.totalorder %v685, %v696
      %vm711 = vcmp.eq.s32.totalorder %v686, %v696
      %vm712 = vcmp.eq.s32.totalorder %v687, %v696
      %vm713 = vcmp.eq.s32.totalorder %v688, %v696
      %vm714 = vcmp.eq.s32.totalorder %v689, %v696
      %vm715 = vcmp.eq.s32.totalorder %v690, %v696
      %vm716 = vcmp.eq.s32.totalorder %v691, %v696
      %vm717 = vcmp.eq.s32.totalorder %v692, %v696
      %vm718 = vcmp.eq.s32.totalorder %v693, %v696
      %vm719 = vcmp.eq.s32.totalorder %v694, %v696
      %vm720 = vcmp.eq.s32.totalorder %v695, %v696
      %v721 = vadd.s32 %v696, 6
      %vm722 = vcmp.eq.s32.totalorder %v672, %v721
      %vm723 = vcmp.eq.s32.totalorder %v673, %v721
      %vm724 = vcmp.eq.s32.totalorder %v674, %v721
      %vm725 = vcmp.eq.s32.totalorder %v675, %v721
      %vm726 = vcmp.eq.s32.totalorder %v676, %v721
      %vm727 = vcmp.eq.s32.totalorder %v677, %v721
      %vm728 = vcmp.eq.s32.totalorder %v678, %v721
      %vm729 = vcmp.eq.s32.totalorder %v679, %v721
      %vm730 = vcmp.eq.s32.totalorder %v680, %v721
      %vm731 = vcmp.eq.s32.totalorder %v681, %v721
      %vm732 = vcmp.eq.s32.totalorder %v682, %v721
      %vm733 = vcmp.eq.s32.totalorder %v683, %v721
      %vm734 = vcmp.eq.s32.totalorder %v684, %v721
      %vm735 = vcmp.eq.s32.totalorder %v685, %v721
      %vm736 = vcmp.eq.s32.totalorder %v686, %v721
      %vm737 = vcmp.eq.s32.totalorder %v687, %v721
      %vm738 = vcmp.eq.s32.totalorder %v688, %v721
      %vm739 = vcmp.eq.s32.totalorder %v689, %v721
      %vm740 = vcmp.eq.s32.totalorder %v690, %v721
      %vm741 = vcmp.eq.s32.totalorder %v691, %v721
      %vm742 = vcmp.eq.s32.totalorder %v692, %v721
      %vm743 = vcmp.eq.s32.totalorder %v693, %v721
      %vm744 = vcmp.eq.s32.totalorder %v694, %v721
      %vm745 = vcmp.eq.s32.totalorder %v695, %v721
      %vm746 = vmor %vm697, %vm722
      %vm747 = vmor %vm698, %vm723
      %vm748 = vmor %vm699, %vm724
      %vm749 = vmor %vm700, %vm725
      %vm750 = vmor %vm701, %vm726
      %vm751 = vmor %vm702, %vm727
      %vm752 = vmor %vm703, %vm728
      %vm753 = vmor %vm704, %vm729
      %vm754 = vmor %vm705, %vm730
      %vm755 = vmor %vm706, %vm731
      %vm756 = vmor %vm707, %vm732
      %vm757 = vmor %vm708, %vm733
      %vm758 = vmor %vm709, %vm734
      %vm759 = vmor %vm710, %vm735
      %vm760 = vmor %vm711, %vm736
      %vm761 = vmor %vm712, %vm737
      %vm762 = vmor %vm713, %vm738
      %vm763 = vmor %vm714, %vm739
      %vm764 = vmor %vm715, %vm740
      %vm765 = vmor %vm716, %vm741
      %vm766 = vmor %vm717, %vm742
      %vm767 = vmor %vm718, %vm743
      %vm768 = vmor %vm719, %vm744
      %vm769 = vmor %vm720, %vm745
      %v770 = vand.u32 %v671, 15
      %vm771 = vcmp.lt.s32.totalorder %v770, 15
      %vm772 = vmand %vm746, %vm771
      %vm773 = vmand %vm747, %vm771
      %vm774 = vmand %vm748, %vm771
      %vm775 = vmand %vm749, %vm771
      %vm776 = vmand %vm750, %vm771
      %vm777 = vmand %vm751, %vm771
      %vm778 = vmand %vm752, %vm771
      %vm779 = vmand %vm753, %vm771
      %vm780 = vmand %vm754, %vm771
      %vm781 = vmand %vm755, %vm771
      %vm782 = vmand %vm756, %vm771
      %vm783 = vmand %vm757, %vm771
      %vm784 = vmand %vm758, %vm771
      %vm785 = vmand %vm759, %vm771
      %vm786 = vmand %vm760, %vm771
      %vm787 = vmand %vm761, %vm771
      %vm788 = vmand %vm762, %vm771
      %vm789 = vmand %vm763, %vm771
      %vm790 = vmand %vm764, %vm771
      %vm791 = vmand %vm765, %vm771
      %vm792 = vmand %vm766, %vm771
      %vm793 = vmand %vm767, %vm771
      %vm794 = vmand %vm768, %vm771
      %vm795 = vmand %vm769, %vm771
      %v796 = vsel %vm772, 0.0, -1e+09
      %v797 = vsel %vm773, 0.0, -1e+09
      %v798 = vsel %vm774, 0.0, -1e+09
      %v799 = vsel %vm775, 0.0, -1e+09
      %v800 = vsel %vm776, 0.0, -1e+09
      %v801 = vsel %vm777, 0.0, -1e+09
      %v802 = vsel %vm778, 0.0, -1e+09
      %v803 = vsel %vm779, 0.0, -1e+09
      %v804 = vsel %vm780, 0.0, -1e+09
      %v805 = vsel %vm781, 0.0, -1e+09
      %v806 = vsel %vm782, 0.0, -1e+09
      %v807 = vsel %vm783, 0.0, -1e+09
      %v808 = vsel %vm784, 0.0, -1e+09
      %v809 = vsel %vm785, 0.0, -1e+09
      %v810 = vsel %vm786, 0.0, -1e+09
      %v811 = vsel %vm787, 0.0, -1e+09
      %v812 = vsel %vm788, 0.0, -1e+09
      %v813 = vsel %vm789, 0.0, -1e+09
      %v814 = vsel %vm790, 0.0, -1e+09
      %v815 = vsel %vm791, 0.0, -1e+09
      %v816 = vsel %vm792, 0.0, -1e+09
      %v817 = vsel %vm793, 0.0, -1e+09
      %v818 = vsel %vm794, 0.0, -1e+09
      %v819 = vsel %vm795, 0.0, -1e+09
      %v821 = vsel %vm527, %v633, 0
      %v824 = vsel %vm527, %v634, 0
      %v827 = vsel %vm527, %v635, 0
      %v830 = vsel %vm527, %v636, 0
      %v833 = vsel %vm527, %v637, 0
      %v836 = vsel %vm527, %v638, 0
      %v839 = vsel %vm527, %v639, 0
      %v842 = vsel %vm527, %v640, 0
      %v845 = vsel %vm527, %v641, 0
      %v848 = vsel %vm527, %v642, 0
      %v851 = vsel %vm527, %v643, 0
      %v854 = vsel %vm527, %v644, 0
      %856 = vmatpush.bf16.xpose.msra.mxu0 0
      %857 = vmatpush.bf16.xpose.msra.mxu0 0
      %858 = vmatpush.bf16.xpose.msra.mxu0 %v544
      %859 = vmatpush.bf16.xpose.msra.mxu0 %v541
      %860 = vmatpush.bf16.xpose.msra.mxu0 %v538
      %861 = vmatpush.bf16.xpose.msra.mxu0 %v535
      %862 = vmatpush.bf16.xpose.msra.mxu0 %v532
      %863 = vmatpush.bf16.xpose.msra.mxu0 %v529
      %864 = vmatmul.bf16.gmra.mxu0 %v821
      %v865 = vpop.f32.mrf.mxu0
      %v866 = vadd.f32 %v796, %v865
      %v867 = vpop.f32.mrf.mxu0
      %v868 = vadd.f32 %v797, %v867
      %869 = vmatmul.bf16.gmra.mxu0 %v824
      %v870 = vpop.f32.mrf.mxu0
      %v871 = vadd.f32 %v798, %v870
      %v872 = vpop.f32.mrf.mxu0
      %v873 = vadd.f32 %v799, %v872
      %874 = vmatmul.bf16.gmra.mxu0 %v827
      %v875 = vpop.f32.mrf.mxu0
      %v876 = vadd.f32 %v800, %v875
      %v877 = vpop.f32.mrf.mxu0
      %v878 = vadd.f32 %v801, %v877
      %879 = vmatmul.bf16.gmra.mxu0 %v830
      %v880 = vpop.f32.mrf.mxu0
      %v881 = vadd.f32 %v802, %v880
      %v882 = vpop.f32.mrf.mxu0
      %v883 = vadd.f32 %v803, %v882
      %884 = vmatmul.bf16.gmra.mxu0 %v833
      %v885 = vpop.f32.mrf.mxu0
      %v886 = vadd.f32 %v804, %v885
      %v887 = vpop.f32.mrf.mxu0
      %v888 = vadd.f32 %v805, %v887
      %889 = vmatmul.bf16.gmra.mxu0 %v836
      %v890 = vpop.f32.mrf.mxu0
      %v891 = vadd.f32 %v806, %v890
      %v892 = vpop.f32.mrf.mxu0
      %v893 = vadd.f32 %v807, %v892
      %894 = vmatmul.bf16.gmra.mxu0 %v839
      %v895 = vpop.f32.mrf.mxu0
      %v896 = vadd.f32 %v808, %v895
      %v897 = vpop.f32.mrf.mxu0
      %v898 = vadd.f32 %v809, %v897
      %899 = vmatmul.bf16.gmra.mxu0 %v842
      %v900 = vpop.f32.mrf.mxu0
      %v901 = vadd.f32 %v810, %v900
      %v902 = vpop.f32.mrf.mxu0
      %v903 = vadd.f32 %v811, %v902
      %904 = vmatmul.bf16.gmra.mxu0 %v845
      %v905 = vpop.f32.mrf.mxu0
      %v906 = vadd.f32 %v812, %v905
      %v907 = vpop.f32.mrf.mxu0
      %v908 = vadd.f32 %v813, %v907
      %909 = vmatmul.bf16.gmra.mxu0 %v848
      %v910 = vpop.f32.mrf.mxu0
      %v911 = vadd.f32 %v814, %v910
      %v912 = vpop.f32.mrf.mxu0
      %v913 = vadd.f32 %v815, %v912
      %914 = vmatmul.bf16.gmra.mxu0 %v851
      %v915 = vpop.f32.mrf.mxu0
      %v916 = vadd.f32 %v816, %v915
      %v917 = vpop.f32.mrf.mxu0
      %v918 = vadd.f32 %v817, %v917
      %919 = vmatmul.bf16.gmra.mxu0 %v854
      %v920 = vpop.f32.mrf.mxu0
      %v921 = vadd.f32 %v818, %v920
      %v922 = vpop.f32.mrf.mxu0
      %v923 = vadd.f32 %v819, %v922
      %924 = vdwg.mxu0
      %vm925 = vcmask 785408
      %v926 = vsel %vm925, %v866, -inf
      %927 = vmax.xlane.f32.xlu0 %v926
      %v928 = vpop.xlane.xlu0 %927
      %v929 = vsel %vm925, %v868, -inf
      %930 = vmax.xlane.f32.xlu0 %v929
      %v931 = vpop.xlane.xlu0 %930
      %v932 = vsel %vm925, %v871, -inf
      %933 = vmax.xlane.f32.xlu0 %v932
      %v934 = vpop.xlane.xlu0 %933
      %v935 = vsel %vm925, %v873, -inf
      %936 = vmax.xlane.f32.xlu0 %v935
      %v937 = vpop.xlane.xlu0 %936
      %v938 = vsel %vm925, %v876, -inf
      %939 = vmax.xlane.f32.xlu0 %v938
      %v940 = vpop.xlane.xlu0 %939
      %v941 = vsel %vm925, %v878, -inf
      %942 = vmax.xlane.f32.xlu0 %v941
      %v943 = vpop.xlane.xlu0 %942
      %v944 = vsel %vm925, %v881, -inf
      %945 = vmax.xlane.f32.xlu0 %v944
      %v946 = vpop.xlane.xlu0 %945
      %v947 = vsel %vm925, %v883, -inf
      %948 = vmax.xlane.f32.xlu0 %v947
      %v949 = vpop.xlane.xlu0 %948
      %v950 = vsel %vm925, %v886, -inf
      %951 = vmax.xlane.f32.xlu0 %v950
      %v952 = vpop.xlane.xlu0 %951
      %v953 = vsel %vm925, %v888, -inf
      %954 = vmax.xlane.f32.xlu0 %v953
      %v955 = vpop.xlane.xlu0 %954
      %v956 = vsel %vm925, %v891, -inf
      %957 = vmax.xlane.f32.xlu0 %v956
      %v958 = vpop.xlane.xlu0 %957
      %v959 = vsel %vm925, %v893, -inf
      %960 = vmax.xlane.f32.xlu0 %v959
      %v961 = vpop.xlane.xlu0 %960
      %v962 = vsel %vm925, %v896, -inf
      %963 = vmax.xlane.f32.xlu0 %v962
      %v964 = vpop.xlane.xlu0 %963
      %v965 = vsel %vm925, %v898, -inf
      %966 = vmax.xlane.f32.xlu0 %v965
      %v967 = vpop.xlane.xlu0 %966
      %v968 = vsel %vm925, %v901, -inf
      %969 = vmax.xlane.f32.xlu0 %v968
      %v970 = vpop.xlane.xlu0 %969
      %v971 = vsel %vm925, %v903, -inf
      %972 = vmax.xlane.f32.xlu0 %v971
      %v973 = vpop.xlane.xlu0 %972
      %v974 = vsel %vm925, %v906, -inf
      %975 = vmax.xlane.f32.xlu0 %v974
      %v976 = vpop.xlane.xlu0 %975
      %v977 = vsel %vm925, %v908, -inf
      %978 = vmax.xlane.f32.xlu0 %v977
      %v979 = vpop.xlane.xlu0 %978
      %v980 = vsel %vm925, %v911, -inf
      %981 = vmax.xlane.f32.xlu0 %v980
      %v982 = vpop.xlane.xlu0 %981
      %v983 = vsel %vm925, %v913, -inf
      %984 = vmax.xlane.f32.xlu0 %v983
      %v985 = vpop.xlane.xlu0 %984
      %v986 = vsel %vm925, %v916, -inf
      %987 = vmax.xlane.f32.xlu0 %v986
      %v988 = vpop.xlane.xlu0 %987
      %v989 = vsel %vm925, %v918, -inf
      %990 = vmax.xlane.f32.xlu0 %v989
      %v991 = vpop.xlane.xlu0 %990
      %v992 = vsel %vm925, %v921, -inf
      %993 = vmax.xlane.f32.xlu0 %v992
      %v994 = vpop.xlane.xlu0 %993
      %v995 = vsel %vm925, %v923, -inf
      %996 = vmax.xlane.f32.xlu0 %v995
      %v997 = vpop.xlane.xlu0 %996
      %v998 = vsub.f32 %v866, %v928
      %v999 = vsub.f32 %v868, %v931
      %v1000 = vsub.f32 %v871, %v934
      %v1001 = vsub.f32 %v873, %v937
      %v1002 = vsub.f32 %v876, %v940
      %v1003 = vsub.f32 %v878, %v943
      %v1004 = vsub.f32 %v881, %v946
      %v1005 = vsub.f32 %v883, %v949
      %v1006 = vsub.f32 %v886, %v952
      %v1007 = vsub.f32 %v888, %v955
      %v1008 = vsub.f32 %v891, %v958
      %v1009 = vsub.f32 %v893, %v961
      %v1010 = vsub.f32 %v896, %v964
      %v1011 = vsub.f32 %v898, %v967
      %v1012 = vsub.f32 %v901, %v970
      %v1013 = vsub.f32 %v903, %v973
      %v1014 = vsub.f32 %v906, %v976
      %v1015 = vsub.f32 %v908, %v979
      %v1016 = vsub.f32 %v911, %v982
      %v1017 = vsub.f32 %v913, %v985
      %v1018 = vsub.f32 %v916, %v988
      %v1019 = vsub.f32 %v918, %v991
      %v1020 = vsub.f32 %v921, %v994
      %v1021 = vsub.f32 %v923, %v997
      %v1022 = vmul.f32 %v998, 1.442695
      %v1023 = vpow.pop %v1022
      %v1024 = vmul.f32 %v999, 1.442695
      %v1025 = vpow.pop %v1024
      %v1026 = vmul.f32 %v1000, 1.442695
      %v1027 = vpow.pop %v1026
      %v1028 = vmul.f32 %v1001, 1.442695
      %v1029 = vpow.pop %v1028
      %v1030 = vmul.f32 %v1002, 1.442695
      %v1031 = vpow.pop %v1030
      %v1032 = vmul.f32 %v1003, 1.442695
      %v1033 = vpow.pop %v1032
      %v1034 = vmul.f32 %v1004, 1.442695
      %v1035 = vpow.pop %v1034
      %v1036 = vmul.f32 %v1005, 1.442695
      %v1037 = vpow.pop %v1036
      %v1038 = vmul.f32 %v1006, 1.442695
      %v1039 = vpow.pop %v1038
      %v1040 = vmul.f32 %v1007, 1.442695
      %v1041 = vpow.pop %v1040
      %v1042 = vmul.f32 %v1008, 1.442695
      %v1043 = vpow.pop %v1042
      %v1044 = vmul.f32 %v1009, 1.442695
      %v1045 = vpow.pop %v1044
      %v1046 = vmul.f32 %v1010, 1.442695
      %v1047 = vpow.pop %v1046
      %v1048 = vmul.f32 %v1011, 1.442695
      %v1049 = vpow.pop %v1048
      %v1050 = vmul.f32 %v1012, 1.442695
      %v1051 = vpow.pop %v1050
      %v1052 = vmul.f32 %v1013, 1.442695
      %v1053 = vpow.pop %v1052
      %v1054 = vmul.f32 %v1014, 1.442695
      %v1055 = vpow.pop %v1054
      %v1056 = vmul.f32 %v1015, 1.442695
      %v1057 = vpow.pop %v1056
      %v1058 = vmul.f32 %v1016, 1.442695
      %v1059 = vpow.pop %v1058
      %v1060 = vmul.f32 %v1017, 1.442695
      %v1061 = vpow.pop %v1060
      %v1062 = vmul.f32 %v1018, 1.442695
      %v1063 = vpow.pop %v1062
      %v1064 = vmul.f32 %v1019, 1.442695
      %v1065 = vpow.pop %v1064
      %v1066 = vmul.f32 %v1020, 1.442695
      %v1067 = vpow.pop %v1066
      %v1068 = vmul.f32 %v1021, 1.442695
      %v1069 = vpow.pop %v1068
      %v1070 = vsel %vm925, %v1023, 0.0
      %1071 = vadd.xlane.f32.xlu0 %v1070
      %v1072 = vpop.xlane.xlu0 %1071
      %v1073 = vsel %vm925, %v1025, 0.0
      %1074 = vadd.xlane.f32.xlu0 %v1073
      %v1075 = vpop.xlane.xlu0 %1074
      %v1076 = vsel %vm925, %v1027, 0.0
      %1077 = vadd.xlane.f32.xlu0 %v1076
      %v1078 = vpop.xlane.xlu0 %1077
      %v1079 = vsel %vm925, %v1029, 0.0
      %1080 = vadd.xlane.f32.xlu0 %v1079
      %v1081 = vpop.xlane.xlu0 %1080
      %v1082 = vsel %vm925, %v1031, 0.0
      %1083 = vadd.xlane.f32.xlu0 %v1082
      %v1084 = vpop.xlane.xlu0 %1083
      %v1085 = vsel %vm925, %v1033, 0.0
      %1086 = vadd.xlane.f32.xlu0 %v1085
      %v1087 = vpop.xlane.xlu0 %1086
      %v1088 = vsel %vm925, %v1035, 0.0
      %1089 = vadd.xlane.f32.xlu0 %v1088
      %v1090 = vpop.xlane.xlu0 %1089
      %v1091 = vsel %vm925, %v1037, 0.0
      %1092 = vadd.xlane.f32.xlu0 %v1091
      %v1093 = vpop.xlane.xlu0 %1092
      %v1094 = vsel %vm925, %v1039, 0.0
      %1095 = vadd.xlane.f32.xlu0 %v1094
      %v1096 = vpop.xlane.xlu0 %1095
      %v1097 = vsel %vm925, %v1041, 0.0
      %1098 = vadd.xlane.f32.xlu0 %v1097
      %v1099 = vpop.xlane.xlu0 %1098
      %v1100 = vsel %vm925, %v1043, 0.0
      %1101 = vadd.xlane.f32.xlu0 %v1100
      %v1102 = vpop.xlane.xlu0 %1101
      %v1103 = vsel %vm925, %v1045, 0.0
      %1104 = vadd.xlane.f32.xlu0 %v1103
      %v1105 = vpop.xlane.xlu0 %1104
      %v1106 = vsel %vm925, %v1047, 0.0
      %1107 = vadd.xlane.f32.xlu0 %v1106
      %v1108 = vpop.xlane.xlu0 %1107
      %v1109 = vsel %vm925, %v1049, 0.0
      %1110 = vadd.xlane.f32.xlu0 %v1109
      %v1111 = vpop.xlane.xlu0 %1110
      %v1112 = vsel %vm925, %v1051, 0.0
      %1113 = vadd.xlane.f32.xlu0 %v1112
      %v1114 = vpop.xlane.xlu0 %1113
      %v1115 = vsel %vm925, %v1053, 0.0
      %1116 = vadd.xlane.f32.xlu0 %v1115
      %v1117 = vpop.xlane.xlu0 %1116
      %v1118 = vsel %vm925, %v1055, 0.0
      %1119 = vadd.xlane.f32.xlu0 %v1118
      %v1120 = vpop.xlane.xlu0 %1119
      %v1121 = vsel %vm925, %v1057, 0.0
      %1122 = vadd.xlane.f32.xlu0 %v1121
      %v1123 = vpop.xlane.xlu0 %1122
      %v1124 = vsel %vm925, %v1059, 0.0
      %1125 = vadd.xlane.f32.xlu0 %v1124
      %v1126 = vpop.xlane.xlu0 %1125
      %v1127 = vsel %vm925, %v1061, 0.0
      %1128 = vadd.xlane.f32.xlu0 %v1127
      %v1129 = vpop.xlane.xlu0 %1128
      %v1130 = vsel %vm925, %v1063, 0.0
      %1131 = vadd.xlane.f32.xlu0 %v1130
      %v1132 = vpop.xlane.xlu0 %1131
      %v1133 = vsel %vm925, %v1065, 0.0
      %1134 = vadd.xlane.f32.xlu0 %v1133
      %v1135 = vpop.xlane.xlu0 %1134
      %v1136 = vsel %vm925, %v1067, 0.0
      %1137 = vadd.xlane.f32.xlu0 %v1136
      %v1138 = vpop.xlane.xlu0 %1137
      %v1139 = vsel %vm925, %v1069, 0.0
      %1140 = vadd.xlane.f32.xlu0 %v1139
      %v1141 = vpop.xlane.xlu0 %1140
      %v1142 = vpack.c.bf16 %v1025, %v1023
      %v1143 = vpack.c.bf16 %v1029, %v1027
      %v1144 = vpack.c.bf16 %v1033, %v1031
      %v1145 = vpack.c.bf16 %v1037, %v1035
      %v1146 = vpack.c.bf16 %v1041, %v1039
      %v1147 = vpack.c.bf16 %v1045, %v1043
      %v1148 = vpack.c.bf16 %v1049, %v1047
      %v1149 = vpack.c.bf16 %v1053, %v1051
      %v1150 = vpack.c.bf16 %v1057, %v1055
      %v1151 = vpack.c.bf16 %v1061, %v1059
      %v1152 = vpack.c.bf16 %v1065, %v1063
      %v1153 = vpack.c.bf16 %v1069, %v1067
      %v1155 = vsel %vm925, %v1142, 0
      %v1158 = vsel %vm925, %v1143, 0
      %v1161 = vsel %vm925, %v1144, 0
      %v1164 = vsel %vm925, %v1145, 0
      %v1167 = vsel %vm925, %v1146, 0
      %v1170 = vsel %vm925, %v1147, 0
      %v1173 = vsel %vm925, %v1148, 0
      %v1176 = vsel %vm925, %v1149, 0
      %v1179 = vsel %vm925, %v1150, 0
      %v1182 = vsel %vm925, %v1151, 0
      %v1185 = vsel %vm925, %v1152, 0
      %v1188 = vsel %vm925, %v1153, 0
      %1190 = vmatpush.bf16.msra.mxu0 0
      %1191 = vmatpush.bf16.msra.mxu0 0
      %1192 = vmatpush.bf16.msra.mxu0 %v506
      %1193 = vmatpush.bf16.msra.mxu0 %v505
      %1194 = vmatpush.bf16.msra.mxu0 %v504
      %1195 = vmatpush.bf16.msra.mxu0 %v503
      %1196 = vmatpush.bf16.msra.mxu0 %v502
      %1197 = vmatpush.bf16.msra.mxu0 %v501
      %1198 = vmatmul.bf16.gmra.mxu0 %v1155
      %v1199 = vpop.f32.mrf.mxu0
      %v1200 = vadd.f32 0.0, %v1199
      %v1201 = vpop.f32.mrf.mxu0
      %v1202 = vadd.f32 0.0, %v1201
      %1203 = vmatmul.bf16.gmra.mxu0 %v1158
      %v1204 = vpop.f32.mrf.mxu0
      %v1205 = vadd.f32 0.0, %v1204
      %v1206 = vpop.f32.mrf.mxu0
      %v1207 = vadd.f32 0.0, %v1206
      %1208 = vmatmul.bf16.gmra.mxu0 %v1161
      %v1209 = vpop.f32.mrf.mxu0
      %v1210 = vadd.f32 0.0, %v1209
      %v1211 = vpop.f32.mrf.mxu0
      %v1212 = vadd.f32 0.0, %v1211
      %1213 = vmatmul.bf16.gmra.mxu0 %v1164
      %v1214 = vpop.f32.mrf.mxu0
      %v1215 = vadd.f32 0.0, %v1214
      %v1216 = vpop.f32.mrf.mxu0
      %v1217 = vadd.f32 0.0, %v1216
      %1218 = vmatmul.bf16.gmra.mxu0 %v1167
      %v1219 = vpop.f32.mrf.mxu0
      %v1220 = vadd.f32 0.0, %v1219
      %v1221 = vpop.f32.mrf.mxu0
      %v1222 = vadd.f32 0.0, %v1221
      %1223 = vmatmul.bf16.gmra.mxu0 %v1170
      %v1224 = vpop.f32.mrf.mxu0
      %v1225 = vadd.f32 0.0, %v1224
      %v1226 = vpop.f32.mrf.mxu0
      %v1227 = vadd.f32 0.0, %v1226
      %1228 = vmatmul.bf16.gmra.mxu0 %v1173
      %v1229 = vpop.f32.mrf.mxu0
      %v1230 = vadd.f32 0.0, %v1229
      %v1231 = vpop.f32.mrf.mxu0
      %v1232 = vadd.f32 0.0, %v1231
      %1233 = vmatmul.bf16.gmra.mxu0 %v1176
      %v1234 = vpop.f32.mrf.mxu0
      %v1235 = vadd.f32 0.0, %v1234
      %v1236 = vpop.f32.mrf.mxu0
      %v1237 = vadd.f32 0.0, %v1236
      %1238 = vmatmul.bf16.gmra.mxu0 %v1179
      %v1239 = vpop.f32.mrf.mxu0
      %v1240 = vadd.f32 0.0, %v1239
      %v1241 = vpop.f32.mrf.mxu0
      %v1242 = vadd.f32 0.0, %v1241
      %1243 = vmatmul.bf16.gmra.mxu0 %v1182
      %v1244 = vpop.f32.mrf.mxu0
      %v1245 = vadd.f32 0.0, %v1244
      %v1246 = vpop.f32.mrf.mxu0
      %v1247 = vadd.f32 0.0, %v1246
      %1248 = vmatmul.bf16.gmra.mxu0 %v1185
      %v1249 = vpop.f32.mrf.mxu0
      %v1250 = vadd.f32 0.0, %v1249
      %v1251 = vpop.f32.mrf.mxu0
      %v1252 = vadd.f32 0.0, %v1251
      %1253 = vmatmul.bf16.gmra.mxu0 %v1188
      %v1254 = vpop.f32.mrf.mxu0
      %v1255 = vadd.f32 0.0, %v1254
      %v1256 = vpop.f32.mrf.mxu0
      %v1257 = vadd.f32 0.0, %v1256
      %1258 = vdwg.mxu0
      %v1259 = vrcp.pop %v1072
      %v1260 = vrcp.pop %v1075
      %v1261 = vrcp.pop %v1078
      %v1262 = vrcp.pop %v1081
      %v1263 = vrcp.pop %v1084
      %v1264 = vrcp.pop %v1087
      %v1265 = vrcp.pop %v1090
      %v1266 = vrcp.pop %v1093
      %v1267 = vrcp.pop %v1096
      %v1268 = vrcp.pop %v1099
      %v1269 = vrcp.pop %v1102
      %v1270 = vrcp.pop %v1105
      %v1271 = vrcp.pop %v1108
      %v1272 = vrcp.pop %v1111
      %v1273 = vrcp.pop %v1114
      %v1274 = vrcp.pop %v1117
      %v1275 = vrcp.pop %v1120
      %v1276 = vrcp.pop %v1123
      %v1277 = vrcp.pop %v1126
      %v1278 = vrcp.pop %v1129
      %v1279 = vrcp.pop %v1132
      %v1280 = vrcp.pop %v1135
      %v1281 = vrcp.pop %v1138
      %v1282 = vrcp.pop %v1141
      %v1283 = vmul.f32 %v1200, %v1259
      %v1284 = vmul.f32 %v1202, %v1260
      %v1285 = vmul.f32 %v1205, %v1261
      %v1286 = vmul.f32 %v1207, %v1262
      %v1287 = vmul.f32 %v1210, %v1263
      %v1288 = vmul.f32 %v1212, %v1264
      %v1289 = vmul.f32 %v1215, %v1265
      %v1290 = vmul.f32 %v1217, %v1266
      %v1291 = vmul.f32 %v1220, %v1267
      %v1292 = vmul.f32 %v1222, %v1268
      %v1293 = vmul.f32 %v1225, %v1269
      %v1294 = vmul.f32 %v1227, %v1270
      %v1295 = vmul.f32 %v1230, %v1271
      %v1296 = vmul.f32 %v1232, %v1272
      %v1297 = vmul.f32 %v1235, %v1273
      %v1298 = vmul.f32 %v1237, %v1274
      %v1299 = vmul.f32 %v1240, %v1275
      %v1300 = vmul.f32 %v1242, %v1276
      %v1301 = vmul.f32 %v1245, %v1277
      %v1302 = vmul.f32 %v1247, %v1278
      %v1303 = vmul.f32 %v1250, %v1279
      %v1304 = vmul.f32 %v1252, %v1280
      %v1305 = vmul.f32 %v1255, %v1281
      %v1306 = vmul.f32 %v1257, %v1282
      %1319 = vrot.lane.b32.xlu0 %v1295, 32
      %v1320 = vpop.permute.xlu0 %1319
      %1321 = vrot.lane.b32.xlu0 %v1296, 32
      %v1322 = vpop.permute.xlu0 %1321
      %1323 = vrot.lane.b32.xlu0 %v1297, 32
      %v1324 = vpop.permute.xlu0 %1323
      %1325 = vrot.lane.b32.xlu0 %v1298, 32
      %v1326 = vpop.permute.xlu0 %1325
      %1327 = vrot.lane.b32.xlu0 %v1299, 32
      %v1328 = vpop.permute.xlu0 %1327
      %1329 = vrot.lane.b32.xlu0 %v1300, 32
      %v1330 = vpop.permute.xlu0 %1329
      %1331 = vrot.lane.b32.xlu0 %v1301, 32
      %v1332 = vpop.permute.xlu0 %1331
      %1333 = vrot.lane.b32.xlu0 %v1302, 32
      %v1334 = vpop.permute.xlu0 %1333
      %1335 = vrot.lane.b32.xlu0 %v1303, 32
      %v1336 = vpop.permute.xlu0 %1335
      %1337 = vrot.lane.b32.xlu0 %v1304, 32
      %v1338 = vpop.permute.xlu0 %1337
      %1339 = vrot.lane.b32.xlu0 %v1305, 32
      %v1340 = vpop.permute.xlu0 %1339
      %1341 = vrot.lane.b32.xlu0 %v1306, 32
      %v1342 = vpop.permute.xlu0 %1341
      %v1355 = vsel %vm527, %v1283, %v1320
      %v1356 = vsel %vm527, %v1284, %v1322
      %v1357 = vsel %vm527, %v1285, %v1324
      %v1358 = vsel %vm527, %v1286, %v1326
      %v1359 = vsel %vm527, %v1287, %v1328
      %v1360 = vsel %vm527, %v1288, %v1330
      %v1361 = vsel %vm527, %v1289, %v1332
      %v1362 = vsel %vm527, %v1290, %v1334
      %v1363 = vsel %vm527, %v1291, %v1336
      %v1364 = vsel %vm527, %v1292, %v1338
      %v1365 = vsel %vm527, %v1293, %v1340
      %v1366 = vsel %vm527, %v1294, %v1342
      %v1367 = vpack.c.bf16 %v1356, %v1355
      %v1368 = vpack.c.bf16 %v1358, %v1357
      %v1369 = vpack.c.bf16 %v1360, %v1359
      %v1370 = vpack.c.bf16 %v1362, %v1361
      %v1371 = vpack.c.bf16 %v1364, %v1363
      %v1372 = vpack.c.bf16 %v1366, %v1365
      %v1373 = vld [vmem:[%s5] sm:$0xf]
      %v1374 = vld [vmem:[%s5 + $0x4] sm:$0xf]
      %v1375 = vld [vmem:[%s5 + $0x8] sm:$0xf]
      %v1376 = vld [vmem:[%s5 + $0xc] sm:$0xf]
      %v1377 = vld [vmem:[%s5 + $0x10] sm:$0xf]
      %v1378 = vld [vmem:[%s5 + $0x14] sm:$0xf]
      %v1379 = vld [vmem:[%s5 + $0x18] sm:$0xf]
      %v1380 = vld [vmem:[%s5 + $0x1c] sm:$0xf]
      %v1381 = vld [vmem:[%s6] sm:$0x1]
      %v1383 = vperm.slane %v1381, 0
      %v1393 = vunpack.c.l.b16 %v1373
      %v1394 = vunpack.c.l.b16 %v1374
      %v1395 = vunpack.c.l.b16 %v1375
      %v1396 = vunpack.c.l.b16 %v1376
      %v1397 = vunpack.c.l.b16 %v1377
      %v1398 = vunpack.c.l.b16 %v1378
      %v1399 = vunpack.c.l.b16 %v1379
      %v1400 = vunpack.c.l.b16 %v1380
      %v1401 = vpack.c.b16 %v1394, %v1393
      %v1402 = vpack.c.b16 %v1396, %v1395
      %v1403 = vpack.c.b16 %v1398, %v1397
      %v1404 = vpack.c.b16 %v1400, %v1399
      %vm1409 = vcmask 523264
      %v1411 = vsel %vm1409, %v1367, 0
      %v1414 = vsel %vm1409, %v1368, 0
      %v1417 = vsel %vm1409, %v1369, 0
      %v1420 = vsel %vm1409, %v1370, 0
      %v1423 = vsel %vm1409, %v1371, 0
      %v1426 = vsel %vm1409, %v1372, 0
      %1428 = vmatpush.bf16.msra.mxu0 0
      %1429 = vmatpush.bf16.msra.mxu0 0
      %1430 = vmatpush.bf16.msra.mxu0 0
      %1431 = vmatpush.bf16.msra.mxu0 0
      %1432 = vmatpush.bf16.msra.mxu0 %v1404
      %1433 = vmatpush.bf16.msra.mxu0 %v1403
      %1434 = vmatpush.bf16.msra.mxu0 %v1402
      %1435 = vmatpush.bf16.msra.mxu0 %v1401
      %1436 = vmatmul.bf16.gmra.mxu0 %v1411
      %v1437 = vpop.f32.mrf.mxu0
      %v1438 = vadd.f32 %v1383, %v1437
      %v1439 = vpop.f32.mrf.mxu0
      %v1440 = vadd.f32 %v1383, %v1439
      %1441 = vmatmul.bf16.gmra.mxu0 %v1414
      %v1442 = vpop.f32.mrf.mxu0
      %v1443 = vadd.f32 %v1383, %v1442
      %v1444 = vpop.f32.mrf.mxu0
      %v1445 = vadd.f32 %v1383, %v1444
      %1446 = vmatmul.bf16.gmra.mxu0 %v1417
      %v1447 = vpop.f32.mrf.mxu0
      %v1448 = vadd.f32 %v1383, %v1447
      %v1449 = vpop.f32.mrf.mxu0
      %v1450 = vadd.f32 %v1383, %v1449
      %1451 = vmatmul.bf16.gmra.mxu0 %v1420
      %v1452 = vpop.f32.mrf.mxu0
      %v1453 = vadd.f32 %v1383, %v1452
      %v1454 = vpop.f32.mrf.mxu0
      %v1455 = vadd.f32 %v1383, %v1454
      %1456 = vmatmul.bf16.gmra.mxu0 %v1423
      %v1457 = vpop.f32.mrf.mxu0
      %v1458 = vadd.f32 %v1383, %v1457
      %v1459 = vpop.f32.mrf.mxu0
      %v1460 = vadd.f32 %v1383, %v1459
      %1461 = vmatmul.bf16.gmra.mxu0 %v1426
      %v1462 = vpop.f32.mrf.mxu0
      %v1463 = vadd.f32 %v1383, %v1462
      %v1464 = vpop.f32.mrf.mxu0
      %v1465 = vadd.f32 %v1383, %v1464
      %1466 = vdwg.mxu0
      %v1467 = vpack.c.bf16 %v1440, %v1438
      %v1468 = vpack.c.bf16 %v1445, %v1443
      %v1469 = vpack.c.bf16 %v1450, %v1448
      %v1470 = vpack.c.bf16 %v1455, %v1453
      %v1471 = vpack.c.bf16 %v1460, %v1458
      %v1472 = vpack.c.bf16 %v1465, %v1463
      %v1473 = vld [vmem:[%s7] sm:$0xf]
      %v1474 = vld [vmem:[%s7 + $0x4] sm:$0xf]
      %v1475 = vld [vmem:[%s7 + $0x8] sm:$0xf]
      %v1476 = vld [vmem:[%s7 + $0xc] sm:$0xf]
      %v1477 = vld [vmem:[%s8] sm:$0x1]
      %v1479 = vperm.slane %v1477, 0
      %v1485 = vunpack.c.l.b16 %v1473
      %v1486 = vunpack.c.l.b16 %v1474
      %v1487 = vunpack.c.l.b16 %v1475
      %v1488 = vunpack.c.l.b16 %v1476
      %v1489 = vpack.c.b16 %v1486, %v1485
      %v1490 = vpack.c.b16 %v1488, %v1487
      %v1494 = vsel %vm527, %v1467, 0
      %v1497 = vsel %vm527, %v1468, 0
      %v1500 = vsel %vm527, %v1469, 0
      %v1503 = vsel %vm527, %v1470, 0
      %v1506 = vsel %vm527, %v1471, 0
      %v1509 = vsel %vm527, %v1472, 0
      %1511 = vmatpush.bf16.msra.mxu0 0
      %1512 = vmatpush.bf16.msra.mxu0 0
      %1513 = vmatpush.bf16.msra.mxu0 0
      %1514 = vmatpush.bf16.msra.mxu0 0
      %1515 = vmatpush.bf16.msra.mxu0 0
      %1516 = vmatpush.bf16.msra.mxu0 0
      %1517 = vmatpush.bf16.msra.mxu0 %v1490
      %1518 = vmatpush.bf16.msra.mxu0 %v1489
      %1519 = vmatmul.bf16.gmra.mxu0 %v1494
      %v1520 = vpop.f32.mrf.mxu0
      %v1521 = vadd.f32 %v1479, %v1520
      %v1522 = vpop.f32.mrf.mxu0
      %v1523 = vadd.f32 %v1479, %v1522
      %1524 = vmatmul.bf16.gmra.mxu0 %v1497
      %v1525 = vpop.f32.mrf.mxu0
      %v1526 = vadd.f32 %v1479, %v1525
      %v1527 = vpop.f32.mrf.mxu0
      %v1528 = vadd.f32 %v1479, %v1527
      %1529 = vmatmul.bf16.gmra.mxu0 %v1500
      %v1530 = vpop.f32.mrf.mxu0
      %v1531 = vadd.f32 %v1479, %v1530
      %v1532 = vpop.f32.mrf.mxu0
      %v1533 = vadd.f32 %v1479, %v1532
      %1534 = vmatmul.bf16.gmra.mxu0 %v1503
      %v1535 = vpop.f32.mrf.mxu0
      %v1536 = vadd.f32 %v1479, %v1535
      %v1537 = vpop.f32.mrf.mxu0
      %v1538 = vadd.f32 %v1479, %v1537
      %1539 = vmatmul.bf16.gmra.mxu0 %v1506
      %v1540 = vpop.f32.mrf.mxu0
      %v1541 = vadd.f32 %v1479, %v1540
      %v1542 = vpop.f32.mrf.mxu0
      %v1543 = vadd.f32 %v1479, %v1542
      %1544 = vmatmul.bf16.gmra.mxu0 %v1509
      %v1545 = vpop.f32.mrf.mxu0
      %v1546 = vadd.f32 %v1479, %v1545
      %v1547 = vpop.f32.mrf.mxu0
      %v1548 = vadd.f32 %v1479, %v1547
      %1549 = vdwg.mxu0
      %v1550 = vtanh.pop %v1521
      %v1551 = vtanh.pop %v1523
      %v1552 = vtanh.pop %v1526
      %v1553 = vtanh.pop %v1528
      %v1554 = vtanh.pop %v1531
      %v1555 = vtanh.pop %v1533
      %v1556 = vtanh.pop %v1536
      %v1557 = vtanh.pop %v1538
      %v1558 = vtanh.pop %v1541
      %v1559 = vtanh.pop %v1543
      %v1560 = vtanh.pop %v1546
      %v1561 = vtanh.pop %v1548
      %v1562 = vld [vmem:[%s9] sm:$0xff]
      %v1563 = vld [vmem:[%s9 + $0x8] sm:$0xff]
      %v1564 = vld [vmem:[%s9 + $0x10] sm:$0xff]
      %v1565 = vld [vmem:[%s9 + $0x18] sm:$0xff]
      %v1567 = vsel %vm527, %v1550, 0
      %v1570 = vsel %vm527, %v1551, 0
      %v1573 = vsel %vm527, %v1552, 0
      %v1576 = vsel %vm527, %v1553, 0
      %v1579 = vsel %vm527, %v1554, 0
      %v1582 = vsel %vm527, %v1555, 0
      %v1585 = vsel %vm527, %v1556, 0
      %v1588 = vsel %vm527, %v1557, 0
      %v1591 = vsel %vm527, %v1558, 0
      %v1594 = vsel %vm527, %v1559, 0
      %v1597 = vsel %vm527, %v1560, 0
      %v1600 = vsel %vm527, %v1561, 0
      %1602 = vmatpush.msra.mxu0 0.0
      %1603 = vmatpush.msra.mxu0 0.0
      %1604 = vmatpush.msra.mxu0 0.0
      %1605 = vmatpush.msra.mxu0 0.0
      %1606 = vmatpush.msra.mxu0 0.0
      %1607 = vmatpush.msra.mxu0 0.0
      %1608 = vmatpush.msra.mxu0 0.0
      %1609 = vmatpush.msra.mxu0 0.0
      %1610 = vmatpush.msra.mxu0 0.0
      %1611 = vmatpush.msra.mxu0 0.0
      %1612 = vmatpush.msra.mxu0 0.0
      %1613 = vmatpush.msra.mxu0 0.0
      %1614 = vmatpush.msra.mxu0 %v1565
      %1615 = vmatpush.msra.mxu0 %v1564
      %1616 = vmatpush.msra.mxu0 %v1563
      %1617 = vmatpush.msra.mxu0 %v1562
      %1618 = vmatmul.f32.gmra.mxu0 %v1567
      %v1619 = vpop.f32.mrf.mxu0
      %v1620 = vadd.f32 0.0, %v1619
      %1621 = vmatmul.f32.gmra.mxu0 %v1570
      %v1622 = vpop.f32.mrf.mxu0
      %v1623 = vadd.f32 0.0, %v1622
      %1624 = vmatmul.f32.gmra.mxu0 %v1573
      %v1625 = vpop.f32.mrf.mxu0
      %v1626 = vadd.f32 0.0, %v1625
      %1627 = vmatmul.f32.gmra.mxu0 %v1576
      %v1628 = vpop.f32.mrf.mxu0
      %v1629 = vadd.f32 0.0, %v1628
      %1630 = vmatmul.f32.gmra.mxu0 %v1579
      %v1631 = vpop.f32.mrf.mxu0
      %v1632 = vadd.f32 0.0, %v1631
      %1633 = vmatmul.f32.gmra.mxu0 %v1582
      %v1634 = vpop.f32.mrf.mxu0
      %v1635 = vadd.f32 0.0, %v1634
      %1636 = vmatmul.f32.gmra.mxu0 %v1585
      %v1637 = vpop.f32.mrf.mxu0
      %v1638 = vadd.f32 0.0, %v1637
      %1639 = vmatmul.f32.gmra.mxu0 %v1588
      %v1640 = vpop.f32.mrf.mxu0
      %v1641 = vadd.f32 0.0, %v1640
      %1642 = vmatmul.f32.gmra.mxu0 %v1591
      %v1643 = vpop.f32.mrf.mxu0
      %v1644 = vadd.f32 0.0, %v1643
      %1645 = vmatmul.f32.gmra.mxu0 %v1594
      %v1646 = vpop.f32.mrf.mxu0
      %v1647 = vadd.f32 0.0, %v1646
      %1648 = vmatmul.f32.gmra.mxu0 %v1597
      %v1649 = vpop.f32.mrf.mxu0
      %v1650 = vadd.f32 0.0, %v1649
      %1651 = vmatmul.f32.gmra.mxu0 %v1600
      %v1652 = vpop.f32.mrf.mxu0
      %v1653 = vadd.f32 0.0, %v1652
      %1654 = vdwg.mxu0
      %v1655 = vsel %vm772, 1.0, 0.0
      %v1656 = vsel %vm773, 1.0, 0.0
      %v1657 = vsel %vm774, 1.0, 0.0
      %v1658 = vsel %vm775, 1.0, 0.0
      %v1659 = vsel %vm776, 1.0, 0.0
      %v1660 = vsel %vm777, 1.0, 0.0
      %v1661 = vsel %vm778, 1.0, 0.0
      %v1662 = vsel %vm779, 1.0, 0.0
      %v1663 = vsel %vm780, 1.0, 0.0
      %v1664 = vsel %vm781, 1.0, 0.0
      %v1665 = vsel %vm782, 1.0, 0.0
      %v1666 = vsel %vm783, 1.0, 0.0
      %v1668 = vsel %vm925, %v1655, 0
      %v1671 = vsel %vm925, %v1656, 0
      %v1674 = vsel %vm925, %v1657, 0
      %v1677 = vsel %vm925, %v1658, 0
      %v1680 = vsel %vm925, %v1659, 0
      %v1683 = vsel %vm925, %v1660, 0
      %v1686 = vsel %vm925, %v1661, 0
      %v1689 = vsel %vm925, %v1662, 0
      %v1692 = vsel %vm925, %v1663, 0
      %v1695 = vsel %vm925, %v1664, 0
      %v1698 = vsel %vm925, %v1665, 0
      %v1701 = vsel %vm925, %v1666, 0
      %1703 = vmatpush.msra.mxu0 0.0
      %1704 = vmatpush.msra.mxu0 0.0
      %1705 = vmatpush.msra.mxu0 0.0
      %1706 = vmatpush.msra.mxu0 0.0
      %1707 = vmatpush.msra.mxu0 %v1653
      %1708 = vmatpush.msra.mxu0 %v1650
      %1709 = vmatpush.msra.mxu0 %v1647
      %1710 = vmatpush.msra.mxu0 %v1644
      %1711 = vmatpush.msra.mxu0 %v1641
      %1712 = vmatpush.msra.mxu0 %v1638
      %1713 = vmatpush.msra.mxu0 %v1635
      %1714 = vmatpush.msra.mxu0 %v1632
      %1715 = vmatpush.msra.mxu0 %v1629
      %1716 = vmatpush.msra.mxu0 %v1626
      %1717 = vmatpush.msra.mxu0 %v1623
      %1718 = vmatpush.msra.mxu0 %v1620
      %1719 = vmatmul.f32.gmra.mxu0 %v1668
      %v1720 = vpop.f32.mrf.mxu0
      %v1721 = vadd.f32 0.0, %v1720
      %1722 = vmatmul.f32.gmra.mxu0 %v1671
      %v1723 = vpop.f32.mrf.mxu0
      %v1724 = vadd.f32 0.0, %v1723
      %1725 = vmatmul.f32.gmra.mxu0 %v1674
      %v1726 = vpop.f32.mrf.mxu0
      %v1727 = vadd.f32 0.0, %v1726
      %1728 = vmatmul.f32.gmra.mxu0 %v1677
      %v1729 = vpop.f32.mrf.mxu0
      %v1730 = vadd.f32 0.0, %v1729
      %1731 = vmatmul.f32.gmra.mxu0 %v1680
      %v1732 = vpop.f32.mrf.mxu0
      %v1733 = vadd.f32 0.0, %v1732
      %1734 = vmatmul.f32.gmra.mxu0 %v1683
      %v1735 = vpop.f32.mrf.mxu0
      %v1736 = vadd.f32 0.0, %v1735
      %1737 = vmatmul.f32.gmra.mxu0 %v1686
      %v1738 = vpop.f32.mrf.mxu0
      %v1739 = vadd.f32 0.0, %v1738
      %1740 = vmatmul.f32.gmra.mxu0 %v1689
      %v1741 = vpop.f32.mrf.mxu0
      %v1742 = vadd.f32 0.0, %v1741
      %1743 = vmatmul.f32.gmra.mxu0 %v1692
      %v1744 = vpop.f32.mrf.mxu0
      %v1745 = vadd.f32 0.0, %v1744
      %1746 = vmatmul.f32.gmra.mxu0 %v1695
      %v1747 = vpop.f32.mrf.mxu0
      %v1748 = vadd.f32 0.0, %v1747
      %1749 = vmatmul.f32.gmra.mxu0 %v1698
      %v1750 = vpop.f32.mrf.mxu0
      %v1751 = vadd.f32 0.0, %v1750
      %1752 = vmatmul.f32.gmra.mxu0 %v1701
      %v1753 = vpop.f32.mrf.mxu0
      %v1754 = vadd.f32 0.0, %v1753
      %1755 = vdwg.mxu0
      %v1756 = vmul.f32 %v1721, 0.06666667
      %v1757 = vmul.f32 %v1724, 0.06666667
      %v1758 = vmul.f32 %v1727, 0.06666667
      %v1759 = vmul.f32 %v1730, 0.06666667
      %v1760 = vmul.f32 %v1733, 0.06666667
      %v1761 = vmul.f32 %v1736, 0.06666667
      %v1762 = vmul.f32 %v1739, 0.06666667
      %v1763 = vmul.f32 %v1742, 0.06666667
      %v1764 = vmul.f32 %v1745, 0.06666667
      %v1765 = vmul.f32 %v1748, 0.06666667
      %v1766 = vmul.f32 %v1751, 0.06666667
      %v1767 = vmul.f32 %v1754, 0.06666667
      %v1768 = vsub.f32 %v1620, %v1756
      %v1769 = vsub.f32 %v1623, %v1757
      %v1770 = vsub.f32 %v1626, %v1758
      %v1771 = vsub.f32 %v1629, %v1759
      %v1772 = vsub.f32 %v1632, %v1760
      %v1773 = vsub.f32 %v1635, %v1761
      %v1774 = vsub.f32 %v1638, %v1762
      %v1775 = vsub.f32 %v1641, %v1763
      %v1776 = vsub.f32 %v1644, %v1764
      %v1777 = vsub.f32 %v1647, %v1765
      %v1778 = vsub.f32 %v1650, %v1766
      %v1779 = vsub.f32 %v1653, %v1767
      %v1780 = vmul.f32 %v1768, 1.442695
      %v1781 = vpow.pop %v1780
      %v1782 = vmul.f32 %v1769, 1.442695
      %v1783 = vpow.pop %v1782
      %v1784 = vmul.f32 %v1770, 1.442695
      %v1785 = vpow.pop %v1784
      %v1786 = vmul.f32 %v1771, 1.442695
      %v1787 = vpow.pop %v1786
      %v1788 = vmul.f32 %v1772, 1.442695
      %v1789 = vpow.pop %v1788
      %v1790 = vmul.f32 %v1773, 1.442695
      %v1791 = vpow.pop %v1790
      %v1792 = vmul.f32 %v1774, 1.442695
      %v1793 = vpow.pop %v1792
      %v1794 = vmul.f32 %v1775, 1.442695
      %v1795 = vpow.pop %v1794
      %v1796 = vmul.f32 %v1776, 1.442695
      %v1797 = vpow.pop %v1796
      %v1798 = vmul.f32 %v1777, 1.442695
      %v1799 = vpow.pop %v1798
      %v1800 = vmul.f32 %v1778, 1.442695
      %v1801 = vpow.pop %v1800
      %v1802 = vmul.f32 %v1779, 1.442695
      %v1803 = vpow.pop %v1802
      %1804 = vmatpush.msra.mxu0 0.0
      %1805 = vmatpush.msra.mxu0 0.0
      %1806 = vmatpush.msra.mxu0 0.0
      %1807 = vmatpush.msra.mxu0 0.0
      %1808 = vmatpush.msra.mxu0 %v1803
      %1809 = vmatpush.msra.mxu0 %v1801
      %1810 = vmatpush.msra.mxu0 %v1799
      %1811 = vmatpush.msra.mxu0 %v1797
      %1812 = vmatpush.msra.mxu0 %v1795
      %1813 = vmatpush.msra.mxu0 %v1793
      %1814 = vmatpush.msra.mxu0 %v1791
      %1815 = vmatpush.msra.mxu0 %v1789
      %1816 = vmatpush.msra.mxu0 %v1787
      %1817 = vmatpush.msra.mxu0 %v1785
      %1818 = vmatpush.msra.mxu0 %v1783
      %1819 = vmatpush.msra.mxu0 %v1781
      %1820 = vmatmul.f32.gmra.mxu0 %v1668
      %v1821 = vpop.f32.mrf.mxu0
      %v1822 = vadd.f32 0.0, %v1821
      %1823 = vmatmul.f32.gmra.mxu0 %v1671
      %v1824 = vpop.f32.mrf.mxu0
      %v1825 = vadd.f32 0.0, %v1824
      %1826 = vmatmul.f32.gmra.mxu0 %v1674
      %v1827 = vpop.f32.mrf.mxu0
      %v1828 = vadd.f32 0.0, %v1827
      %1829 = vmatmul.f32.gmra.mxu0 %v1677
      %v1830 = vpop.f32.mrf.mxu0
      %v1831 = vadd.f32 0.0, %v1830
      %1832 = vmatmul.f32.gmra.mxu0 %v1680
      %v1833 = vpop.f32.mrf.mxu0
      %v1834 = vadd.f32 0.0, %v1833
      %1835 = vmatmul.f32.gmra.mxu0 %v1683
      %v1836 = vpop.f32.mrf.mxu0
      %v1837 = vadd.f32 0.0, %v1836
      %1838 = vmatmul.f32.gmra.mxu0 %v1686
      %v1839 = vpop.f32.mrf.mxu0
      %v1840 = vadd.f32 0.0, %v1839
      %1841 = vmatmul.f32.gmra.mxu0 %v1689
      %v1842 = vpop.f32.mrf.mxu0
      %v1843 = vadd.f32 0.0, %v1842
      %1844 = vmatmul.f32.gmra.mxu0 %v1692
      %v1845 = vpop.f32.mrf.mxu0
      %v1846 = vadd.f32 0.0, %v1845
      %1847 = vmatmul.f32.gmra.mxu0 %v1695
      %v1848 = vpop.f32.mrf.mxu0
      %v1849 = vadd.f32 0.0, %v1848
      %1850 = vmatmul.f32.gmra.mxu0 %v1698
      %v1851 = vpop.f32.mrf.mxu0
      %v1852 = vadd.f32 0.0, %v1851
      %1853 = vmatmul.f32.gmra.mxu0 %v1701
      %v1854 = vpop.f32.mrf.mxu0
      %v1855 = vadd.f32 0.0, %v1854
      %1856 = vdwg.mxu0
      %v1857 = vrcp.pop %v1822
      %v1858 = vmul.f32 %v1822, %v1857
      %v1859 = vsub.f32 1.0, %v1858
      %v1860 = vmul.f32 %v1857, %v1859
      %v1861 = vadd.f32 %v1857, %v1860
      %vm1862 = vweird.f32 %v1822
      %vm1863 = vweird.f32 %v1857
      %vm1864 = vmor %vm1862, %vm1863
      %v1865 = vsel %vm1864, %v1857, %v1861
      %v1866 = vand.u32 2147483647, %v1822
      %vm1867 = vcmp.eq.f32.partialorder %v1866, 8.507059e+37
      %v1868 = vand.u32 %v1822, 2147483648
      %v1869 = vor.u32 1.1754944e-38, %v1868
      %v1870 = vsel %vm1867, %v1869, %v1865
      %v1871 = vmul.f32 %v1781, %v1870
      %v1872 = vrcp.pop %v1825
      %v1873 = vmul.f32 %v1825, %v1872
      %v1874 = vsub.f32 1.0, %v1873
      %v1875 = vmul.f32 %v1872, %v1874
      %v1876 = vadd.f32 %v1872, %v1875
      %vm1877 = vweird.f32 %v1825
      %vm1878 = vweird.f32 %v1872
      %vm1879 = vmor %vm1877, %vm1878
      %v1880 = vsel %vm1879, %v1872, %v1876
      %v1881 = vand.u32 2147483647, %v1825
      %vm1882 = vcmp.eq.f32.partialorder %v1881, 8.507059e+37
      %v1883 = vand.u32 %v1825, 2147483648
      %v1884 = vor.u32 1.1754944e-38, %v1883
      %v1885 = vsel %vm1882, %v1884, %v1880
      %v1886 = vmul.f32 %v1783, %v1885
      %v1887 = vrcp.pop %v1828
      %v1888 = vmul.f32 %v1828, %v1887
      %v1889 = vsub.f32 1.0, %v1888
      %v1890 = vmul.f32 %v1887, %v1889
      %v1891 = vadd.f32 %v1887, %v1890
      %vm1892 = vweird.f32 %v1828
      %vm1893 = vweird.f32 %v1887
      %vm1894 = vmor %vm1892, %vm1893
      %v1895 = vsel %vm1894, %v1887, %v1891
      %v1896 = vand.u32 2147483647, %v1828
      %vm1897 = vcmp.eq.f32.partialorder %v1896, 8.507059e+37
      %v1898 = vand.u32 %v1828, 2147483648
      %v1899 = vor.u32 1.1754944e-38, %v1898
      %v1900 = vsel %vm1897, %v1899, %v1895
      %v1901 = vmul.f32 %v1785, %v1900
      %v1902 = vrcp.pop %v1831
      %v1903 = vmul.f32 %v1831, %v1902
      %v1904 = vsub.f32 1.0, %v1903
      %v1905 = vmul.f32 %v1902, %v1904
      %v1906 = vadd.f32 %v1902, %v1905
      %vm1907 = vweird.f32 %v1831
      %vm1908 = vweird.f32 %v1902
      %vm1909 = vmor %vm1907, %vm1908
      %v1910 = vsel %vm1909, %v1902, %v1906
      %v1911 = vand.u32 2147483647, %v1831
      %vm1912 = vcmp.eq.f32.partialorder %v1911, 8.507059e+37
      %v1913 = vand.u32 %v1831, 2147483648
      %v1914 = vor.u32 1.1754944e-38, %v1913
      %v1915 = vsel %vm1912, %v1914, %v1910
      %v1916 = vmul.f32 %v1787, %v1915
      %v1917 = vrcp.pop %v1834
      %v1918 = vmul.f32 %v1834, %v1917
      %v1919 = vsub.f32 1.0, %v1918
      %v1920 = vmul.f32 %v1917, %v1919
      %v1921 = vadd.f32 %v1917, %v1920
      %vm1922 = vweird.f32 %v1834
      %vm1923 = vweird.f32 %v1917
      %vm1924 = vmor %vm1922, %vm1923
      %v1925 = vsel %vm1924, %v1917, %v1921
      %v1926 = vand.u32 2147483647, %v1834
      %vm1927 = vcmp.eq.f32.partialorder %v1926, 8.507059e+37
      %v1928 = vand.u32 %v1834, 2147483648
      %v1929 = vor.u32 1.1754944e-38, %v1928
      %v1930 = vsel %vm1927, %v1929, %v1925
      %v1931 = vmul.f32 %v1789, %v1930
      %v1932 = vrcp.pop %v1837
      %v1933 = vmul.f32 %v1837, %v1932
      %v1934 = vsub.f32 1.0, %v1933
      %v1935 = vmul.f32 %v1932, %v1934
      %v1936 = vadd.f32 %v1932, %v1935
      %vm1937 = vweird.f32 %v1837
      %vm1938 = vweird.f32 %v1932
      %vm1939 = vmor %vm1937, %vm1938
      %v1940 = vsel %vm1939, %v1932, %v1936
      %v1941 = vand.u32 2147483647, %v1837
      %vm1942 = vcmp.eq.f32.partialorder %v1941, 8.507059e+37
      %v1943 = vand.u32 %v1837, 2147483648
      %v1944 = vor.u32 1.1754944e-38, %v1943
      %v1945 = vsel %vm1942, %v1944, %v1940
      %v1946 = vmul.f32 %v1791, %v1945
      %v1947 = vrcp.pop %v1840
      %v1948 = vmul.f32 %v1840, %v1947
      %v1949 = vsub.f32 1.0, %v1948
      %v1950 = vmul.f32 %v1947, %v1949
      %v1951 = vadd.f32 %v1947, %v1950
      %vm1952 = vweird.f32 %v1840
      %vm1953 = vweird.f32 %v1947
      %vm1954 = vmor %vm1952, %vm1953
      %v1955 = vsel %vm1954, %v1947, %v1951
      %v1956 = vand.u32 2147483647, %v1840
      %vm1957 = vcmp.eq.f32.partialorder %v1956, 8.507059e+37
      %v1958 = vand.u32 %v1840, 2147483648
      %v1959 = vor.u32 1.1754944e-38, %v1958
      %v1960 = vsel %vm1957, %v1959, %v1955
      %v1961 = vmul.f32 %v1793, %v1960
      %v1962 = vrcp.pop %v1843
      %v1963 = vmul.f32 %v1843, %v1962
      %v1964 = vsub.f32 1.0, %v1963
      %v1965 = vmul.f32 %v1962, %v1964
      %v1966 = vadd.f32 %v1962, %v1965
      %vm1967 = vweird.f32 %v1843
      %vm1968 = vweird.f32 %v1962
      %vm1969 = vmor %vm1967, %vm1968
      %v1970 = vsel %vm1969, %v1962, %v1966
      %v1971 = vand.u32 2147483647, %v1843
      %vm1972 = vcmp.eq.f32.partialorder %v1971, 8.507059e+37
      %v1973 = vand.u32 %v1843, 2147483648
      %v1974 = vor.u32 1.1754944e-38, %v1973
      %v1975 = vsel %vm1972, %v1974, %v1970
      %v1976 = vmul.f32 %v1795, %v1975
      %v1977 = vrcp.pop %v1846
      %v1978 = vmul.f32 %v1846, %v1977
      %v1979 = vsub.f32 1.0, %v1978
      %v1980 = vmul.f32 %v1977, %v1979
      %v1981 = vadd.f32 %v1977, %v1980
      %vm1982 = vweird.f32 %v1846
      %vm1983 = vweird.f32 %v1977
      %vm1984 = vmor %vm1982, %vm1983
      %v1985 = vsel %vm1984, %v1977, %v1981
      %v1986 = vand.u32 2147483647, %v1846
      %vm1987 = vcmp.eq.f32.partialorder %v1986, 8.507059e+37
      %v1988 = vand.u32 %v1846, 2147483648
      %v1989 = vor.u32 1.1754944e-38, %v1988
      %v1990 = vsel %vm1987, %v1989, %v1985
      %v1991 = vmul.f32 %v1797, %v1990
      %v1992 = vrcp.pop %v1849
      %v1993 = vmul.f32 %v1849, %v1992
      %v1994 = vsub.f32 1.0, %v1993
      %v1995 = vmul.f32 %v1992, %v1994
      %v1996 = vadd.f32 %v1992, %v1995
      %vm1997 = vweird.f32 %v1849
      %vm1998 = vweird.f32 %v1992
      %vm1999 = vmor %vm1997, %vm1998
      %v2000 = vsel %vm1999, %v1992, %v1996
      %v2001 = vand.u32 2147483647, %v1849
      %vm2002 = vcmp.eq.f32.partialorder %v2001, 8.507059e+37
      %v2003 = vand.u32 %v1849, 2147483648
      %v2004 = vor.u32 1.1754944e-38, %v2003
      %v2005 = vsel %vm2002, %v2004, %v2000
      %v2006 = vmul.f32 %v1799, %v2005
      %v2007 = vrcp.pop %v1852
      %v2008 = vmul.f32 %v1852, %v2007
      %v2009 = vsub.f32 1.0, %v2008
      %v2010 = vmul.f32 %v2007, %v2009
      %v2011 = vadd.f32 %v2007, %v2010
      %vm2012 = vweird.f32 %v1852
      %vm2013 = vweird.f32 %v2007
      %vm2014 = vmor %vm2012, %vm2013
      %v2015 = vsel %vm2014, %v2007, %v2011
      %v2016 = vand.u32 2147483647, %v1852
      %vm2017 = vcmp.eq.f32.partialorder %v2016, 8.507059e+37
      %v2018 = vand.u32 %v1852, 2147483648
      %v2019 = vor.u32 1.1754944e-38, %v2018
      %v2020 = vsel %vm2017, %v2019, %v2015
      %v2021 = vmul.f32 %v1801, %v2020
      %v2022 = vrcp.pop %v1855
      %v2023 = vmul.f32 %v1855, %v2022
      %v2024 = vsub.f32 1.0, %v2023
      %v2025 = vmul.f32 %v2022, %v2024
      %v2026 = vadd.f32 %v2022, %v2025
      %vm2027 = vweird.f32 %v1855
      %vm2028 = vweird.f32 %v2022
      %vm2029 = vmor %vm2027, %vm2028
      %v2030 = vsel %vm2029, %v2022, %v2026
      %v2031 = vand.u32 2147483647, %v1855
      %vm2032 = vcmp.eq.f32.partialorder %v2031, 8.507059e+37
      %v2033 = vand.u32 %v1855, 2147483648
      %v2034 = vor.u32 1.1754944e-38, %v2033
      %v2035 = vsel %vm2032, %v2034, %v2030
      %v2036 = vmul.f32 %v1803, %v2035
      %vm2037 = vcmp.eq.s32.totalorder %v646, %v696
      %vm2038 = vmand %vm2037, %vm771
      %v2039 = vsel %vm2038, 1.0, 0.0
      %2041 = vset.pattern.permute.xlu0 0
      %2042 = vperm.xlu0 %2041, %v1871
      %v2043 = vpop.permute.xlu0 %2042
      %2046 = vset.pattern.permute.xlu0 0
      %2047 = vperm.xlu0 %2046, %v1886
      %v2048 = vpop.permute.xlu0 %2047
      %2051 = vset.pattern.permute.xlu0 0
      %2052 = vperm.xlu0 %2051, %v1901
      %v2053 = vpop.permute.xlu0 %2052
      %2056 = vset.pattern.permute.xlu0 0
      %2057 = vperm.xlu0 %2056, %v1916
      %v2058 = vpop.permute.xlu0 %2057
      %2061 = vset.pattern.permute.xlu0 0
      %2062 = vperm.xlu0 %2061, %v1931
      %v2063 = vpop.permute.xlu0 %2062
      %2066 = vset.pattern.permute.xlu0 0
      %2067 = vperm.xlu0 %2066, %v1946
      %v2068 = vpop.permute.xlu0 %2067
      %2071 = vset.pattern.permute.xlu0 0
      %2072 = vperm.xlu0 %2071, %v1961
      %v2073 = vpop.permute.xlu0 %2072
      %2076 = vset.pattern.permute.xlu0 0
      %2077 = vperm.xlu0 %2076, %v1976
      %v2078 = vpop.permute.xlu0 %2077
      %2081 = vset.pattern.permute.xlu0 0
      %2082 = vperm.xlu0 %2081, %v1991
      %v2083 = vpop.permute.xlu0 %2082
      %2086 = vset.pattern.permute.xlu0 0
      %2087 = vperm.xlu0 %2086, %v2006
      %v2088 = vpop.permute.xlu0 %2087
      %2091 = vset.pattern.permute.xlu0 0
      %2092 = vperm.xlu0 %2091, %v2021
      %v2093 = vpop.permute.xlu0 %2092
      %2096 = vset.pattern.permute.xlu0 0
      %2097 = vperm.xlu0 %2096, %v2036
      %v2098 = vpop.permute.xlu0 %2097
      %v2100 = vmul.f32 %v2043, %v1438
      %v2101 = vmul.f32 %v2048, %v1440
      %v2102 = vmul.f32 %v2053, %v1443
      %v2103 = vmul.f32 %v2058, %v1445
      %v2104 = vmul.f32 %v2063, %v1448
      %v2105 = vmul.f32 %v2068, %v1450
      %v2106 = vmul.f32 %v2073, %v1453
      %v2107 = vmul.f32 %v2078, %v1455
      %v2108 = vmul.f32 %v2083, %v1458
      %v2109 = vmul.f32 %v2088, %v1460
      %v2110 = vmul.f32 %v2093, %v1463
      %v2111 = vmul.f32 %v2098, %v1465
      %v2113 = vsel %vm925, %v2039, 0
      %2115 = vmatpush.msra.mxu0 0.0
      %2116 = vmatpush.msra.mxu0 0.0
      %2117 = vmatpush.msra.mxu0 0.0
      %2118 = vmatpush.msra.mxu0 0.0
      %2119 = vmatpush.msra.mxu0 %v2111
      %2120 = vmatpush.msra.mxu0 %v2110
      %2121 = vmatpush.msra.mxu0 %v2109
      %2122 = vmatpush.msra.mxu0 %v2108
      %2123 = vmatpush.msra.mxu0 %v2107
      %2124 = vmatpush.msra.mxu0 %v2106
      %2125 = vmatpush.msra.mxu0 %v2105
      %2126 = vmatpush.msra.mxu0 %v2104
      %2127 = vmatpush.msra.mxu0 %v2103
      %2128 = vmatpush.msra.mxu0 %v2102
      %2129 = vmatpush.msra.mxu0 %v2101
      %2130 = vmatpush.msra.mxu0 %v2100
      %2131 = vmatmul.f32.gmra.mxu0 %v2113
      %v2132 = vpop.f32.mrf.mxu0
      %v2133 = vadd.f32 0.0, %v2132
      %2134 = vdwg.mxu0
      %2135 = vst.msk [vmem:[%s359] sm:$0xff] %vm527, %v2133
      %p2136 = scmp.lt.s32.totalorder %s21, 1
      %s2137 = scalar_select %p2136, %s21, 1
      %s2138 = smul.addr %s2137, 8
      %s2139 = scalar_lea.vmem %s10, %s2138
      // Predicated region
      $region61: #{gca_forward.1} parent=59 // pred_check
        %p2140 = pneg %p254
      $region62: #{gca_forward.1} parent=59 // pred_check_branch
        %2142 = sbr.rel (%p2140) target = $region64
      $region63: #{gca_forward.1} parent=59 // pred_region
        _
      $region64: #{gca_forward.1} parent=59 // pred_fallthru
        _
    $region60: #{gca_forward.1} parent=5 // pred_fallthru
      _
    %p2143 = scmp.le.s32.totalorder 2, %s16
    // Predicated region
    $region65: #{gca_forward.1} parent=5 // pred_check
      %p2144 = pneg %p2143
    $region66: #{gca_forward.1} parent=5 // pred_check_branch
      %2146 = sbr.rel (%p2144) target = $region68
    $region67: #{gca_forward.1} parent=5 // pred_region
      %s2147 = ssub.s32 %s16, 2
      // Predicated region
      $region69: #{gca_forward.1} parent=67 // pred_check
        %p2148 = pneg %p260
      $region70: #{gca_forward.1} parent=67 // pred_check_branch
        %2150 = sbr.rel (%p2148) target = $region72
      $region71: #{gca_forward.1} parent=67 // pred_region
        %p2151 = scmp.lt.s32.totalorder %s22, 1
        %s2152 = scalar_select %p2151, %s22, 1
        %s2153 = smul.addr %s2152, 8
        %s2154 = scalar_lea.vmem %s10, %s2153
      $region72: #{gca_forward.1} parent=67 // pred_fallthru
        _
    $region68: #{gca_forward.1} parent=5 // pred_fallthru
      _
  $region6: #{gca_forward.1} parent=0 // loop_footer
    %s20 = sadd.s32 1, %s16
  $region7: #{gca_forward.1} parent=0 // loop_footer_branch
    %15 = sbr.rel target = $region3
  $region8: #{gca_forward.1} parent=0 // loop_exit
    _

</llo_original>
